<compile_context>
chip_gen: v7x
topology: tpu7x:2x2x1
jax: 0.10.0
libtpu: 0.0.40
codegen_flags: <defaults>
</compile_context>

<pallas_src>
import functools

import jax
import jax.numpy as jnp
from jax.experimental import pallas as pl
from jax.experimental.pallas import tpu as pltpu


# ----------------------------------------------------------------------------
# Activations (static selection, mirrors the PyTorch module's options)
# ----------------------------------------------------------------------------
_TRANSCENDENTAL_ACTS = {"GELU", "SELU", "SiLU", "CELU"}


def _make_activation(name, slope):
    if name == "ReLU":
        return lambda x: jnp.maximum(x, 0.0)
    elif name == "LeakyReLU":
        return lambda x: jnp.where(x >= 0, x, slope * x)
    elif name == "GELU":
        # PyTorch nn.GELU() default is the exact (erf) formulation.
        return lambda x: jax.nn.gelu(x, approximate=False)
    elif name == "SELU":
        return jax.nn.selu
    elif name == "SiLU":
        return jax.nn.silu
    elif name == "CELU":
        return lambda x: jax.nn.celu(x, alpha=slope)
    else:
        raise Exception(
            f"{name} not an available activation. Available options: "
            "ReLU, LeakyReLU, GELU, SELU, SiLU, CELU"
        )


def _round_up(x, m):
    return ((x + m - 1) // m) * m


# ----------------------------------------------------------------------------
# Pallas kernel: whole MLP forward for one batch tile.
# refs = (x_ref, w0, b0, w1, b1, ..., w_{L-1}, b_{L-1}, w_out_row, o_ref)
#   x_ref      : (bt, dim)     compute_dtype
#   w_l        : (in, out)     compute_dtype    b_l : (1, out) f32
#   w_out_row  : (1, units)    f32  (transposed final weight, no bias)
#   o_ref      : (bt, 1)       f32
# ----------------------------------------------------------------------------
def _ynet_kernel(*refs, num_hidden, act_fn, compute_dtype):
    x_ref = refs[0]
    o_ref = refs[-1]
    w_out_ref = refs[-2]

    h = x_ref[...]
    for l in range(num_hidden):
        w_ref = refs[1 + 2 * l]
        b_ref = refs[2 + 2 * l]
        # MXU matmul with f32 accumulation; bias add + activation on the VPU in f32.
        z = jnp.dot(h, w_ref[...], preferred_element_type=jnp.float32) + b_ref[...]
        h = act_fn(z).astype(compute_dtype)

    # Final Linear(units, 1, bias=False): an N=1 matmul would use 1/128..1/256
    # of the MXU columns and pay full push/pop latency.  Do it as a VPU
    # multiply + lane reduce instead (uses otherwise-idle slots).
    hf = h.astype(jnp.float32)
    o_ref[...] = jnp.sum(hf * w_out_ref[...], axis=-1, keepdims=True)


# ----------------------------------------------------------------------------
# Parameter init (deterministic, mimics the PyTorch __init__):
#   weights: kaiming_uniform_ (ReLU/LeakyReLU) or xavier_uniform_ (others)
#   hidden-layer biases: PyTorch Linear default U(-1/sqrt(fan_in), 1/sqrt(fan_in))
#   last layer: no bias.
# ----------------------------------------------------------------------------
def init_y_net_params(key, dim, units, num_layers, activation):
    use_kaiming = activation in ("ReLU", "LeakyReLU")
    sizes = [(dim, units)] + [(units, units)] * (num_layers - 1)
    params = {"weights": [], "biases": []}
    for (fan_in, fan_out) in sizes:
        key, kw, kb = jax.random.split(key, 3)
        if use_kaiming:  # kaiming_uniform_, a=0 (gain sqrt(2))
            bound = jnp.sqrt(6.0 / fan_in)
        else:            # xavier_uniform_
            bound = jnp.sqrt(6.0 / (fan_in + fan_out))
        w = jax.random.uniform(kw, (fan_in, fan_out), jnp.float32, -bound, bound)
        b_bound = 1.0 / jnp.sqrt(fan_in)
        b = jax.random.uniform(kb, (1, fan_out), jnp.float32, -b_bound, b_bound)
        params["weights"].append(w)
        params["biases"].append(b)
    key, kw = jax.random.split(key)
    if use_kaiming:
        bound = jnp.sqrt(6.0 / units)
    else:
        bound = jnp.sqrt(6.0 / (units + 1))
    params["w_out"] = jax.random.uniform(kw, (units, 1), jnp.float32, -bound, bound)
    return params


# ----------------------------------------------------------------------------
# Conservative VMEM estimate (assumes 2x buffering everywhere, f32 working set)
# ----------------------------------------------------------------------------
def _vmem_bytes_estimate(dim, units, num_hidden, bt, compute_dtype):
    isz = jnp.dtype(compute_dtype).itemsize
    x_tile = 2 * bt * dim * isz                                   # input tile (double buffered)
    out_tile = 2 * bt * 4                                         # output tile
    w_bytes = (dim * units + (num_hidden - 1) * units * units) * isz
    b_bytes = num_hidden * units * 4 + units * 4                  # biases + w_out row
    act = 2 * bt * units * 4                                      # f32 working activations
    return x_tile + out_tile + 2 * (w_bytes + b_bytes) + act


# ----------------------------------------------------------------------------
# Wrapper: one pallas_call, grid over batch tiles; weights are VMEM-resident
# (constant index_map -> no re-DMA across grid steps).
# ----------------------------------------------------------------------------
def y_net_forward(x, params, activation="ReLU", slope=0.01,
                  batch_tile=256, compute_dtype=jnp.float32):
    B, dim = x.shape
    num_hidden = len(params["weights"])
    units = params["weights"][0].shape[1]
    act_fn = _make_activation(activation, slope)

    # Effective tile: as large as requested, but never larger than the
    # (8-aligned) batch itself; always a multiple of 8 sublanes.
    bt = min(batch_tile, _round_up(B, 8))
    bt = max(8, (bt // 8) * 8)
    Bp = _round_up(B, bt)

    xp = x.astype(compute_dtype)
    if Bp != B:
        xp = jnp.pad(xp, ((0, Bp - B), (0, 0)))

    # VMEM budget check (v7x has only 64 MiB per TensorCore).
    est = _vmem_bytes_estimate(dim, units, num_hidden, bt, compute_dtype)
    if est > 56 * (1 << 20):
        # For very large `units` switch to a K-tiled accumulator instead of
        # whole-weight residency (not needed at these sizes).
        raise ValueError(
            f"Estimated VMEM use {est / (1 << 20):.1f} MiB exceeds the v7x-safe "
            "budget; reduce batch_tile or tile the weights over K."
        )
    vmem_limit = int(min(max(32 * (1 << 20), est + (4 << 20)), 100 * (1 << 20)))

    kernel = functools.partial(
        _ynet_kernel, num_hidden=num_hidden, act_fn=act_fn,
        compute_dtype=compute_dtype)

    # Build inputs + specs:   x, (w, b) per hidden layer, w_out (as a row)
    inputs = [xp]
    in_specs = [pl.BlockSpec((bt, dim), lambda i: (i, 0))]
    for w, b in zip(params["weights"], params["biases"]):
        inputs += [w.astype(compute_dtype), b.astype(jnp.float32)]
        in_specs += [
            pl.BlockSpec(w.shape, lambda i: (0, 0)),   # full weight, resident
            pl.BlockSpec(b.shape, lambda i: (0, 0)),
        ]
    w_out_row = params["w_out"].reshape(1, units).astype(jnp.float32)
    inputs.append(w_out_row)
    in_specs.append(pl.BlockSpec(w_out_row.shape, lambda i: (0, 0)))

    out_specs = pl.BlockSpec((bt, 1), lambda i: (i, 0))

    # Advisory cost estimate for the XLA scheduler.
    isz = jnp.dtype(compute_dtype).itemsize
    flops = 2 * Bp * (dim * units + (num_hidden - 1) * units * units + units)
    transcendentals = Bp * units * num_hidden if activation in _TRANSCENDENTAL_ACTS else 0
    bytes_accessed = (
        Bp * dim * isz
        + (dim * units + (num_hidden - 1) * units * units) * isz
        + num_hidden * units * 4 + units * 4
        + Bp * 4
    )
    cost = pl.CostEstimate(flops=int(flops),
                           transcendentals=int(transcendentals),
                           bytes_accessed=int(bytes_accessed))

    out = pl.pallas_call(
        kernel,
        out_shape=jax.ShapeDtypeStruct((Bp, 1), jnp.float32),
        grid=(Bp // bt,),
        in_specs=in_specs,
        out_specs=out_specs,
        compiler_params=pltpu.CompilerParams(
            dimension_semantics=("parallel",),
            vmem_limit_bytes=vmem_limit,
        ),
        cost_estimate=cost,
    )(*inputs)

    return out[:B]


# ----------------------------------------------------------------------------
# Pure-JAX reference for sanity checking.
# ----------------------------------------------------------------------------
def y_net_reference(x, params, activation="ReLU", slope=0.01):
    act_fn = _make_activation(activation, slope)
    h = x.astype(jnp.float32)
    for w, b in zip(params["weights"], params["biases"]):
        h = act_fn(h @ w + b)
    return h @ params["w_out"]


if __name__ == "__main__":
    # Small config consistent with Y_Net(dim, units, num_layers, activation, slope)
    dim, units, num_layers = 16, 32, 3
    activation, slope = "ReLU", 0.01
    batch = 512            # 2 grid steps at batch_tile=256 -> both v7x TCs busy

    key = jax.random.PRNGKey(0)
    key, kx = jax.random.split(key)
    x = jax.random.normal(kx, (batch, dim), dtype=jnp.float32)

    params = init_y_net_params(key, dim, units, num_layers, activation)
    ref = y_net_reference(x, params, activation=activation, slope=slope)

    # float32 path
    out = jax.block_until_ready(
        y_net_forward(x, params, activation=activation, slope=slope))
    assert out.shape == (batch, 1), out.shape
    assert jnp.allclose(out, ref, atol=1e-4, rtol=1e-4), "f32 mismatch vs reference"

    # bfloat16 weights/activations (f32 accumulation) path
    out_bf16 = jax.block_until_ready(
        y_net_forward(x, params, activation=activation, slope=slope,
                      compute_dtype=jnp.bfloat16))
    assert out_bf16.shape == (batch, 1), out_bf16.shape
    rel_err = jnp.linalg.norm(out_bf16 - ref) / (jnp.linalg.norm(ref) + 1e-12)
    assert rel_err < 5e-2, f"bf16 relative error too large: {rel_err}"

    print("KERNEL_OK")
</pallas_src>

<mosaic_0001>
module attributes {stable_mosaic.version = 11 : i64} {
  func.func @_ynet_kernel(%arg0: i32, %arg1: memref<256x16xf32, #tpu.memory_space<vmem>>, %arg2: memref<16x32xf32, #tpu.memory_space<vmem>>, %arg3: memref<1x32xf32, #tpu.memory_space<vmem>>, %arg4: memref<32x32xf32, #tpu.memory_space<vmem>>, %arg5: memref<1x32xf32, #tpu.memory_space<vmem>>, %arg6: memref<32x32xf32, #tpu.memory_space<vmem>>, %arg7: memref<1x32xf32, #tpu.memory_space<vmem>>, %arg8: memref<1x32xf32, #tpu.memory_space<vmem>>, %arg9: memref<256x1xf32, #tpu.memory_space<vmem>>) attributes {dimension_semantics = [#tpu.dimension_semantics<parallel>], iteration_bounds = array<i64: 2>, scalar_prefetch = 0 : i64, scratch_operands = 0 : i64, tpu.core_type = #tpu.core_type<tc>, window_params = [{transform_indices = @transform_0, window_bounds = array<i64: 256, 16>}, {pipeline_mode = #tpu.pipeline_mode<synchronous>, transform_indices = @transform_1, window_bounds = array<i64: 16, 32>}, {pipeline_mode = #tpu.pipeline_mode<synchronous>, transform_indices = @transform_2, window_bounds = array<i64: 1, 32>}, {pipeline_mode = #tpu.pipeline_mode<synchronous>, transform_indices = @transform_3, window_bounds = array<i64: 32, 32>}, {pipeline_mode = #tpu.pipeline_mode<synchronous>, transform_indices = @transform_4, window_bounds = array<i64: 1, 32>}, {pipeline_mode = #tpu.pipeline_mode<synchronous>, transform_indices = @transform_5, window_bounds = array<i64: 32, 32>}, {pipeline_mode = #tpu.pipeline_mode<synchronous>, transform_indices = @transform_6, window_bounds = array<i64: 1, 32>}, {pipeline_mode = #tpu.pipeline_mode<synchronous>, transform_indices = @transform_7, window_bounds = array<i64: 1, 32>}, {transform_indices = @transform_8, window_bounds = array<i64: 256, 1>}]} {
    %c0 = arith.constant 0 : index
    %c0_0 = arith.constant 0 : index
    %0 = vector.load %arg1[%c0, %c0_0] : memref<256x16xf32, #tpu.memory_space<vmem>>, vector<256x16xf32>
    %c0_1 = arith.constant 0 : index
    %c0_2 = arith.constant 0 : index
    %1 = vector.load %arg2[%c0_1, %c0_2] : memref<16x32xf32, #tpu.memory_space<vmem>>, vector<16x32xf32>
    %cst = arith.constant dense<0.000000e+00> : vector<256x32xf32>
    %2 = tpu.matmul %0, %1, %cst {dimension_numbers = #tpu.dot_dimension_numbers<[1], [0], [0], [1], [0, 0, 1, 1], [], []>} : vector<256x16xf32>, vector<16x32xf32>, vector<256x32xf32> -> vector<256x32xf32>
    %c0_3 = arith.constant 0 : index
    %c0_4 = arith.constant 0 : index
    %3 = vector.load %arg3[%c0_3, %c0_4] : memref<1x32xf32, #tpu.memory_space<vmem>>, vector<1x32xf32>
    %4 = vector.broadcast %3 : vector<1x32xf32> to vector<256x32xf32>
    %5 = arith.addf %2, %4 : vector<256x32xf32>
    %cst_5 = arith.constant 0.000000e+00 : f32
    %6 = vector.broadcast %cst_5 : f32 to vector<256x32xf32>
    %7 = arith.maximumf %5, %6 : vector<256x32xf32>
    %c0_6 = arith.constant 0 : index
    %c0_7 = arith.constant 0 : index
    %8 = vector.load %arg4[%c0_6, %c0_7] : memref<32x32xf32, #tpu.memory_space<vmem>>, vector<32x32xf32>
    %cst_8 = arith.constant dense<0.000000e+00> : vector<256x32xf32>
    %9 = tpu.matmul %7, %8, %cst_8 {dimension_numbers = #tpu.dot_dimension_numbers<[1], [0], [0], [1], [0, 0, 1, 1], [], []>} : vector<256x32xf32>, vector<32x32xf32>, vector<256x32xf32> -> vector<256x32xf32>
    %c0_9 = arith.constant 0 : index
    %c0_10 = arith.constant 0 : index
    %10 = vector.load %arg5[%c0_9, %c0_10] : memref<1x32xf32, #tpu.memory_space<vmem>>, vector<1x32xf32>
    %11 = vector.broadcast %10 : vector<1x32xf32> to vector<256x32xf32>
    %12 = arith.addf %9, %11 : vector<256x32xf32>
    %cst_11 = arith.constant 0.000000e+00 : f32
    %13 = vector.broadcast %cst_11 : f32 to vector<256x32xf32>
    %14 = arith.maximumf %12, %13 : vector<256x32xf32>
    %c0_12 = arith.constant 0 : index
    %c0_13 = arith.constant 0 : index
    %15 = vector.load %arg6[%c0_12, %c0_13] : memref<32x32xf32, #tpu.memory_space<vmem>>, vector<32x32xf32>
    %cst_14 = arith.constant dense<0.000000e+00> : vector<256x32xf32>
    %16 = tpu.matmul %14, %15, %cst_14 {dimension_numbers = #tpu.dot_dimension_numbers<[1], [0], [0], [1], [0, 0, 1, 1], [], []>} : vector<256x32xf32>, vector<32x32xf32>, vector<256x32xf32> -> vector<256x32xf32>
    %c0_15 = arith.constant 0 : index
    %c0_16 = arith.constant 0 : index
    %17 = vector.load %arg7[%c0_15, %c0_16] : memref<1x32xf32, #tpu.memory_space<vmem>>, vector<1x32xf32>
    %18 = vector.broadcast %17 : vector<1x32xf32> to vector<256x32xf32>
    %19 = arith.addf %16, %18 : vector<256x32xf32>
    %cst_17 = arith.constant 0.000000e+00 : f32
    %20 = vector.broadcast %cst_17 : f32 to vector<256x32xf32>
    %21 = arith.maximumf %19, %20 : vector<256x32xf32>
    %c0_18 = arith.constant 0 : index
    %c0_19 = arith.constant 0 : index
    %22 = vector.load %arg8[%c0_18, %c0_19] : memref<1x32xf32, #tpu.memory_space<vmem>>, vector<1x32xf32>
    %23 = vector.broadcast %22 : vector<1x32xf32> to vector<256x32xf32>
    %24 = arith.mulf %21, %23 : vector<256x32xf32>
    %cst_20 = arith.constant dense<0.000000e+00> : vector<256xf32>
    %25 = vector.multi_reduction <add>, %24, %cst_20 [1] : vector<256x32xf32> to vector<256xf32>
    %26 = vector.shape_cast %25 : vector<256xf32> to vector<256x1xf32>
    %c0_21 = arith.constant 0 : index
    %c0_22 = arith.constant 0 : index
    %27 = vector.load %arg9[%c0_21, %c0_22] : memref<256x1xf32, #tpu.memory_space<vmem>>, vector<256x1xf32>
    tpu.vector_store %arg9[%c0_21, %c0_22], %26 {strides = array<i32>} : memref<256x1xf32, #tpu.memory_space<vmem>>, vector<256x1xf32>,
    return
  }
  func.func @transform_0(%arg0: i32) -> (i32, i32) {
    %c0_i32 = arith.constant 0 : i32
    %c0_i32_0 = arith.constant 0 : i32
    return %arg0, %c0_i32 : i32, i32
  }
  func.func @transform_1(%arg0: i32) -> (i32, i32) {
    %c0_i32 = arith.constant 0 : i32
    %c0_i32_0 = arith.constant 0 : i32
    %c0_i32_1 = arith.constant 0 : i32
    return %c0_i32, %c0_i32_0 : i32, i32
  }
  func.func @transform_2(%arg0: i32) -> (i32, i32) {
    %c0_i32 = arith.constant 0 : i32
    %c0_i32_0 = arith.constant 0 : i32
    %c0_i32_1 = arith.constant 0 : i32
    return %c0_i32, %c0_i32_0 : i32, i32
  }
  func.func @transform_3(%arg0: i32) -> (i32, i32) {
    %c0_i32 = arith.constant 0 : i32
    %c0_i32_0 = arith.constant 0 : i32
    %c0_i32_1 = arith.constant 0 : i32
    return %c0_i32, %c0_i32_0 : i32, i32
  }
  func.func @transform_4(%arg0: i32) -> (i32, i32) {
    %c0_i32 = arith.constant 0 : i32
    %c0_i32_0 = arith.constant 0 : i32
    %c0_i32_1 = arith.constant 0 : i32
    return %c0_i32, %c0_i32_0 : i32, i32
  }
  func.func @transform_5(%arg0: i32) -> (i32, i32) {
    %c0_i32 = arith.constant 0 : i32
    %c0_i32_0 = arith.constant 0 : i32
    %c0_i32_1 = arith.constant 0 : i32
    return %c0_i32, %c0_i32_0 : i32, i32
  }
  func.func @transform_6(%arg0: i32) -> (i32, i32) {
    %c0_i32 = arith.constant 0 : i32
    %c0_i32_0 = arith.constant 0 : i32
    %c0_i32_1 = arith.constant 0 : i32
    return %c0_i32, %c0_i32_0 : i32, i32
  }
  func.func @transform_7(%arg0: i32) -> (i32, i32) {
    %c0_i32 = arith.constant 0 : i32
    %c0_i32_0 = arith.constant 0 : i32
    %c0_i32_1 = arith.constant 0 : i32
    return %c0_i32, %c0_i32_0 : i32, i32
  }
  func.func @transform_8(%arg0: i32) -> (i32, i32) {
    %c0_i32 = arith.constant 0 : i32
    %c0_i32_0 = arith.constant 0 : i32
    return %arg0, %c0_i32 : i32, i32
  }
}

</mosaic_0001>

<llo_original>
// kernel: tpu_custom_call.1
$region0: #{tpu_custom_call.1}
  #allocation0 [shape = 'u32[]', space=smem, size = 0x4, offset = 0x4, fixed_abs, tag = 'smem constant byte address 0x4 - core index']
  #allocation1 [shape = 'u32[144,128]{1,0:T(1,128)}', space=vmem, size = 0x12000, scoped, tag = 'internal scratch']
  %s0 = inlined_call_operand.vmem [shape: f32[512,16], index: 0, kind: input, shape index: {}]
  %s1 = inlined_call_operand.vmem [shape: f32[16,32], index: 1, kind: input, shape index: {}]
  %s2 = inlined_call_operand.vmem [shape: f32[1,32], index: 2, kind: input, shape index: {}]
  %s3 = inlined_call_operand.vmem [shape: f32[32,32], index: 3, kind: input, shape index: {}]
  %s4 = inlined_call_operand.vmem [shape: f32[1,32], index: 4, kind: input, shape index: {}]
  %s5 = inlined_call_operand.vmem [shape: f32[32,32], index: 5, kind: input, shape index: {}]
  %s6 = inlined_call_operand.vmem [shape: f32[1,32], index: 6, kind: input, shape index: {}]
  %s7 = inlined_call_operand.vmem [shape: f32[1,32], index: 7, kind: input, shape index: {}]
  %s8 = inlined_call_operand.vmem [shape: f32[512,1], index: 8, kind: output, shape index: {}]
  %s9 = sld [smem:[#allocation0]]
  $region65: #{tpu_custom_call.1} parent=0
    _
  %s11 = ssub.s32 1, %s9
  %s12 = scalar_select 0, %s11, %s9
  loop: start=0, step=1, limit=4
  $region2: #{tpu_custom_call.1} parent=0 // loop_pre_header
    _
  $region3: #{tpu_custom_call.1} parent=0 // loop_header
    %s14 = sphi 0, %s18
    %p15 = scmp.ge.s32.totalorder %s14, 4
    %s24 = sphi 0, %s26
    %s27 = sphi 0, %s24
    %s28 = sphi 0, %s27
    %s44 = sphi 0, %s28
    %s48 = sphi 0, %s48
    %s50 = sphi 0, %s48
    %s51 = sphi 0, %s50
    %s65 = sphi 0, %s51
    %s69 = sphi 0, %s69
    %s71 = sphi 0, %s69
    %s72 = sphi 0, %s71
    %s86 = sphi 0, %s72
    %s90 = sphi 0, %s90
    %s92 = sphi 0, %s90
    %s93 = sphi 0, %s92
    %s107 = sphi 0, %s93
    %s111 = sphi 0, %s111
    %s113 = sphi 0, %s111
    %s114 = sphi 0, %s113
    %s128 = sphi 0, %s114
    %s132 = sphi 0, %s132
    %s134 = sphi 0, %s132
    %s135 = sphi 0, %s134
    %s149 = sphi 0, %s135
    %s153 = sphi 0, %s153
    %s155 = sphi 0, %s153
    %s156 = sphi 0, %s155
    %s170 = sphi 0, %s156
    %s174 = sphi 0, %s174
    %s176 = sphi 0, %s174
    %s177 = sphi 0, %s176
    %s191 = sphi 0, %s177
    %s197 = sphi 0, %s199
    %s200 = sphi 0, %s197
    %s201 = sphi 0, %s200
    %s217 = sphi 0, %s201
  $region4: #{tpu_custom_call.1} parent=0 // loop_header_branch
    %17 = sbr.rel (%p15) target = $region8
  $region5: #{tpu_custom_call.1} parent=0 // loop_body
    %s19 = ssub.s32 %s14, 1
    %s20 = ssub.s32 %s14, 2
    %s21 = sadd.s32 %s14, 1
    %s22 = ssub.s32 %s14, %s21
    %p23 = scmp.eq.s32.totalorder %s22, 0
    %s25 = sadd.s32 %s24, 1
    %s26 = scalar_select %p23, %s24, %s25
    %p29 = pneg %p23
    %p30 = scmp.eq.s32.totalorder %s14, 1
    %p31 = por %p29, %p30
    %p32 = scmp.ne.s32.totalorder %s24, %s27
    %p33 = scmp.eq.s32.totalorder %s14, 0
    %p34 = por %p32, %p33
    %p35 = scmp.ne.s32.totalorder %s24, %s27
    %p36 = scmp.eq.s32.totalorder %s19, 1
    %p37 = por %p35, %p36
    %p38 = scmp.ne.s32.totalorder %s27, %s28
    %p39 = scmp.eq.s32.totalorder %s19, 0
    %p40 = por %p38, %p39
    %p41 = scmp.ne.s32.totalorder %s27, %s28
    %p42 = scmp.eq.s32.totalorder %s20, 1
    %p43 = por %p41, %p42
    %p45 = scmp.ne.s32.totalorder %s28, %s44
    %p46 = scmp.eq.s32.totalorder %s20, 0
    %p47 = por %p45, %p46
    %s49 = sadd.s32 %s48, 1
    %p52 = scmp.eq.s32.totalorder %s14, 1
    %p53 = scmp.ne.s32.totalorder %s48, %s50
    %p54 = scmp.eq.s32.totalorder %s14, 0
    %p55 = por %p53, %p54
    %p56 = scmp.ne.s32.totalorder %s48, %s50
    %p57 = scmp.eq.s32.totalorder %s19, 1
    %p58 = por %p56, %p57
    %p59 = scmp.ne.s32.totalorder %s50, %s51
    %p60 = scmp.eq.s32.totalorder %s19, 0
    %p61 = por %p59, %p60
    %p62 = scmp.ne.s32.totalorder %s50, %s51
    %p63 = scmp.eq.s32.totalorder %s20, 1
    %p64 = por %p62, %p63
    %p66 = scmp.ne.s32.totalorder %s51, %s65
    %p67 = scmp.eq.s32.totalorder %s20, 0
    %p68 = por %p66, %p67
    %s70 = sadd.s32 %s69, 1
    %p73 = scmp.eq.s32.totalorder %s14, 1
    %p74 = scmp.ne.s32.totalorder %s69, %s71
    %p75 = scmp.eq.s32.totalorder %s14, 0
    %p76 = por %p74, %p75
    %p77 = scmp.ne.s32.totalorder %s69, %s71
    %p78 = scmp.eq.s32.totalorder %s19, 1
    %p79 = por %p77, %p78
    %p80 = scmp.ne.s32.totalorder %s71, %s72
    %p81 = scmp.eq.s32.totalorder %s19, 0
    %p82 = por %p80, %p81
    %p83 = scmp.ne.s32.totalorder %s71, %s72
    %p84 = scmp.eq.s32.totalorder %s20, 1
    %p85 = por %p83, %p84
    %p87 = scmp.ne.s32.totalorder %s72, %s86
    %p88 = scmp.eq.s32.totalorder %s20, 0
    %p89 = por %p87, %p88
    %s91 = sadd.s32 %s90, 1
    %p94 = scmp.eq.s32.totalorder %s14, 1
    %p95 = scmp.ne.s32.totalorder %s90, %s92
    %p96 = scmp.eq.s32.totalorder %s14, 0
    %p97 = por %p95, %p96
    %p98 = scmp.ne.s32.totalorder %s90, %s92
    %p99 = scmp.eq.s32.totalorder %s19, 1
    %p100 = por %p98, %p99
    %p101 = scmp.ne.s32.totalorder %s92, %s93
    %p102 = scmp.eq.s32.totalorder %s19, 0
    %p103 = por %p101, %p102
    %p104 = scmp.ne.s32.totalorder %s92, %s93
    %p105 = scmp.eq.s32.totalorder %s20, 1
    %p106 = por %p104, %p105
    %p108 = scmp.ne.s32.totalorder %s93, %s107
    %p109 = scmp.eq.s32.totalorder %s20, 0
    %p110 = por %p108, %p109
    %s112 = sadd.s32 %s111, 1
    %p115 = scmp.eq.s32.totalorder %s14, 1
    %p116 = scmp.ne.s32.totalorder %s111, %s113
    %p117 = scmp.eq.s32.totalorder %s14, 0
    %p118 = por %p116, %p117
    %p119 = scmp.ne.s32.totalorder %s111, %s113
    %p120 = scmp.eq.s32.totalorder %s19, 1
    %p121 = por %p119, %p120
    %p122 = scmp.ne.s32.totalorder %s113, %s114
    %p123 = scmp.eq.s32.totalorder %s19, 0
    %p124 = por %p122, %p123
    %p125 = scmp.ne.s32.totalorder %s113, %s114
    %p126 = scmp.eq.s32.totalorder %s20, 1
    %p127 = por %p125, %p126
    %p129 = scmp.ne.s32.totalorder %s114, %s128
    %p130 = scmp.eq.s32.totalorder %s20, 0
    %p131 = por %p129, %p130
    %s133 = sadd.s32 %s132, 1
    %p136 = scmp.eq.s32.totalorder %s14, 1
    %p137 = scmp.ne.s32.totalorder %s132, %s134
    %p138 = scmp.eq.s32.totalorder %s14, 0
    %p139 = por %p137, %p138
    %p140 = scmp.ne.s32.totalorder %s132, %s134
    %p141 = scmp.eq.s32.totalorder %s19, 1
    %p142 = por %p140, %p141
    %p143 = scmp.ne.s32.totalorder %s134, %s135
    %p144 = scmp.eq.s32.totalorder %s19, 0
    %p145 = por %p143, %p144
    %p146 = scmp.ne.s32.totalorder %s134, %s135
    %p147 = scmp.eq.s32.totalorder %s20, 1
    %p148 = por %p146, %p147
    %p150 = scmp.ne.s32.totalorder %s135, %s149
    %p151 = scmp.eq.s32.totalorder %s20, 0
    %p152 = por %p150, %p151
    %s154 = sadd.s32 %s153, 1
    %p157 = scmp.eq.s32.totalorder %s14, 1
    %p158 = scmp.ne.s32.totalorder %s153, %s155
    %p159 = scmp.eq.s32.totalorder %s14, 0
    %p160 = por %p158, %p159
    %p161 = scmp.ne.s32.totalorder %s153, %s155
    %p162 = scmp.eq.s32.totalorder %s19, 1
    %p163 = por %p161, %p162
    %p164 = scmp.ne.s32.totalorder %s155, %s156
    %p165 = scmp.eq.s32.totalorder %s19, 0
    %p166 = por %p164, %p165
    %p167 = scmp.ne.s32.totalorder %s155, %s156
    %p168 = scmp.eq.s32.totalorder %s20, 1
    %p169 = por %p167, %p168
    %p171 = scmp.ne.s32.totalorder %s156, %s170
    %p172 = scmp.eq.s32.totalorder %s20, 0
    %p173 = por %p171, %p172
    %s175 = sadd.s32 %s174, 1
    %p178 = scmp.eq.s32.totalorder %s14, 1
    %p179 = scmp.ne.s32.totalorder %s174, %s176
    %p180 = scmp.eq.s32.totalorder %s14, 0
    %p181 = por %p179, %p180
    %p182 = scmp.ne.s32.totalorder %s174, %s176
    %p183 = scmp.eq.s32.totalorder %s19, 1
    %p184 = por %p182, %p183
    %p185 = scmp.ne.s32.totalorder %s176, %s177
    %p186 = scmp.eq.s32.totalorder %s19, 0
    %p187 = por %p185, %p186
    %p188 = scmp.ne.s32.totalorder %s176, %s177
    %p189 = scmp.eq.s32.totalorder %s20, 1
    %p190 = por %p188, %p189
    %p192 = scmp.ne.s32.totalorder %s177, %s191
    %p193 = scmp.eq.s32.totalorder %s20, 0
    %p194 = por %p192, %p193
    %s195 = ssub.s32 %s14, %s21
    %p196 = scmp.eq.s32.totalorder %s195, 0
    %s198 = sadd.s32 %s197, 1
    %s199 = scalar_select %p196, %s197, %s198
    %p202 = pneg %p196
    %p203 = scmp.eq.s32.totalorder %s14, 1
    %p204 = por %p202, %p203
    %p205 = scmp.ne.s32.totalorder %s197, %s200
    %p206 = scmp.eq.s32.totalorder %s14, 0
    %p207 = por %p205, %p206
    %p208 = scmp.ne.s32.totalorder %s197, %s200
    %p209 = scmp.eq.s32.totalorder %s19, 1
    %p210 = por %p208, %p209
    %p211 = scmp.ne.s32.totalorder %s200, %s201
    %p212 = scmp.eq.s32.totalorder %s19, 0
    %p213 = por %p211, %p212
    %p214 = scmp.ne.s32.totalorder %s200, %s201
    %p215 = scmp.eq.s32.totalorder %s20, 1
    %p216 = por %p214, %p215
    %p218 = scmp.ne.s32.totalorder %s201, %s217
    %p219 = scmp.eq.s32.totalorder %s20, 0
    %p220 = por %p218, %p219
    %p221 = scmp.le.s32.totalorder 1, %s14
    %p222 = scmp.lt.s32.totalorder %s14, 3
    %p223 = pnand %p221, %p222
    %p224 = pneg %p223
    // Predicated region
    $region9: #{tpu_custom_call.1} parent=5 // pred_check
      _
    $region10: #{tpu_custom_call.1} parent=5 // pred_check_branch
      %226 = sbr.rel (%p223) target = $region12
    $region11: #{tpu_custom_call.1} parent=5 // pred_region
      %s227 = ssub.s32 %s14, 1
      // Predicated region
      $region13: #{tpu_custom_call.1} parent=11 // pred_check
        %p228 = pneg %p61
      $region14: #{tpu_custom_call.1} parent=11 // pred_check_branch
        %230 = sbr.rel (%p228) target = $region16
      $region15: #{tpu_custom_call.1} parent=11 // pred_region
        _
      $region16: #{tpu_custom_call.1} parent=11 // pred_fallthru
        _
      // Predicated region
      $region17: #{tpu_custom_call.1} parent=11 // pred_check
        %p231 = pneg %p82
      $region18: #{tpu_custom_call.1} parent=11 // pred_check_branch
        %233 = sbr.rel (%p231) target = $region20
      $region19: #{tpu_custom_call.1} parent=11 // pred_region
        _
      $region20: #{tpu_custom_call.1} parent=11 // pred_fallthru
        _
      // Predicated region
      $region21: #{tpu_custom_call.1} parent=11 // pred_check
        %p234 = pneg %p103
      $region22: #{tpu_custom_call.1} parent=11 // pred_check_branch
        %236 = sbr.rel (%p234) target = $region24
      $region23: #{tpu_custom_call.1} parent=11 // pred_region
        _
      $region24: #{tpu_custom_call.1} parent=11 // pred_fallthru
        _
      // Predicated region
      $region25: #{tpu_custom_call.1} parent=11 // pred_check
        %p237 = pneg %p124
      $region26: #{tpu_custom_call.1} parent=11 // pred_check_branch
        %239 = sbr.rel (%p237) target = $region28
      $region27: #{tpu_custom_call.1} parent=11 // pred_region
        _
      $region28: #{tpu_custom_call.1} parent=11 // pred_fallthru
        _
      // Predicated region
      $region29: #{tpu_custom_call.1} parent=11 // pred_check
        %p240 = pneg %p145
      $region30: #{tpu_custom_call.1} parent=11 // pred_check_branch
        %242 = sbr.rel (%p240) target = $region32
      $region31: #{tpu_custom_call.1} parent=11 // pred_region
        _
      $region32: #{tpu_custom_call.1} parent=11 // pred_fallthru
        _
      // Predicated region
      $region33: #{tpu_custom_call.1} parent=11 // pred_check
        %p243 = pneg %p166
      $region34: #{tpu_custom_call.1} parent=11 // pred_check_branch
        %245 = sbr.rel (%p243) target = $region36
      $region35: #{tpu_custom_call.1} parent=11 // pred_region
        _
      $region36: #{tpu_custom_call.1} parent=11 // pred_fallthru
        _
      // Predicated region
      $region37: #{tpu_custom_call.1} parent=11 // pred_check
        %p246 = pneg %p187
      $region38: #{tpu_custom_call.1} parent=11 // pred_check_branch
        %248 = sbr.rel (%p246) target = $region40
      $region39: #{tpu_custom_call.1} parent=11 // pred_region
        _
      $region40: #{tpu_custom_call.1} parent=11 // pred_fallthru
        _
    $region12: #{tpu_custom_call.1} parent=5 // pred_fallthru
      _
    %p249 = scmp.lt.s32.totalorder %s14, 2
    // Predicated region
    $region41: #{tpu_custom_call.1} parent=5 // pred_check
      %p250 = pneg %p249
    $region42: #{tpu_custom_call.1} parent=5 // pred_check_branch
      %252 = sbr.rel (%p250) target = $region44
    $region43: #{tpu_custom_call.1} parent=5 // pred_region
      // Predicated region
      $region45: #{tpu_custom_call.1} parent=43 // pred_check
        %p253 = pneg %p34
      $region46: #{tpu_custom_call.1} parent=43 // pred_check_branch
        %255 = sbr.rel (%p253) target = $region48
      $region47: #{tpu_custom_call.1} parent=43 // pred_region
        %s256 = smul.u32 32, %s14
        %p257 = scmp.lt.s32.totalorder %s256, 63
        %s258 = scalar_select %p257, %s256, 63
        %s259 = smul.addr %s258, 8
        %s260 = scalar_lea.vmem %s0, %s259
        %s261 = smul.u32 32, %s14
      $region48: #{tpu_custom_call.1} parent=43 // pred_fallthru
        _
    $region44: #{tpu_custom_call.1} parent=5 // pred_fallthru
      _
    %p262 = scmp.le.s32.totalorder 1, %s14
    %p263 = scmp.lt.s32.totalorder %s14, 3
    %p264 = pnand %p262, %p263
    %p265 = pneg %p264
    // Predicated region
    $region49: #{tpu_custom_call.1} parent=5 // pred_check
      _
    $region50: #{tpu_custom_call.1} parent=5 // pred_check_branch
      %267 = sbr.rel (%p264) target = $region52
    $region51: #{tpu_custom_call.1} parent=5 // pred_region
      %s268 = ssub.s32 %s14, 1
      %s269 = smul.u32 32, %s19
      %p270 = scmp.lt.s32.totalorder %s269, 63
      %s271 = scalar_select %p270, %s269, 63
      %s272 = smul.addr %s271, 8
      %s273 = scalar_lea.vmem %s0, %s272
      %p274 = pneg %p40
      %p275 = pneg %p37
      %p276 = pneg %p61
      %p277 = pneg %p58
      %p278 = pneg %p82
      %p279 = pneg %p79
      %p280 = pneg %p103
      %p281 = pneg %p100
      %p282 = pneg %p124
      %p283 = pneg %p121
      %p284 = pneg %p145
      %p285 = pneg %p142
      %p286 = pneg %p166
      %p287 = pneg %p163
      %p288 = pneg %p187
      %p289 = pneg %p184
      %p290 = pneg %p213
      %p291 = pneg %p210
      %s292 = smul.u32 32, %s19
      %p293 = scmp.lt.s32.totalorder %s292, 63
      %s294 = scalar_select %p293, %s292, 63
      %s295 = smul.addr %s294, 8
      %s296 = scalar_lea.vmem %s8, %s295
      %s297 = smul.u32 32, %s19
      %p298 = scmp.lt.s32.totalorder %s297, 63
      %s299 = scalar_select %p298, %s297, 63
      %s300 = smul.addr %s299, 8
      %s301 = scalar_lea.vmem %s0, %s300
      %s302 = smul.u32 32, %s19
      %s303 = smul.u32 32, %s19
      %p304 = scmp.lt.s32.totalorder %s303, 63
      %s305 = scalar_select %p304, %s303, 63
      %s306 = smul.addr %s305, 8
      %s307 = scalar_lea.vmem %s8, %s306
      %s308 = smul.u32 32, %s19
      %v309 = vld [vmem:[%s301] sm:$0xff]
      %v310 = vld [vmem:[%s301 + $0x8] sm:$0xff]
      %v311 = vld [vmem:[%s301 + $0x10] sm:$0xff]
      %v312 = vld [vmem:[%s301 + $0x18] sm:$0xff]
      %v313 = vld [vmem:[%s301 + $0x20] sm:$0xff]
      %v314 = vld [vmem:[%s301 + $0x28] sm:$0xff]
      %v315 = vld [vmem:[%s301 + $0x30] sm:$0xff]
      %v316 = vld [vmem:[%s301 + $0x38] sm:$0xff]
      %v317 = vld [vmem:[%s301 + $0x40] sm:$0xff]
      %v318 = vld [vmem:[%s301 + $0x48] sm:$0xff]
      %v319 = vld [vmem:[%s301 + $0x50] sm:$0xff]
      %v320 = vld [vmem:[%s301 + $0x58] sm:$0xff]
      %v321 = vld [vmem:[%s301 + $0x60] sm:$0xff]
      %v322 = vld [vmem:[%s301 + $0x68] sm:$0xff]
      %v323 = vld [vmem:[%s301 + $0x70] sm:$0xff]
      %v324 = vld [vmem:[%s301 + $0x78] sm:$0xff]
      %v325 = vld [vmem:[%s301 + $0x80] sm:$0xff]
      %v326 = vld [vmem:[%s301 + $0x88] sm:$0xff]
      %v327 = vld [vmem:[%s301 + $0x90] sm:$0xff]
      %v328 = vld [vmem:[%s301 + $0x98] sm:$0xff]
      %v329 = vld [vmem:[%s301 + $0xa0] sm:$0xff]
      %v330 = vld [vmem:[%s301 + $0xa8] sm:$0xff]
      %v331 = vld [vmem:[%s301 + $0xb0] sm:$0xff]
      %v332 = vld [vmem:[%s301 + $0xb8] sm:$0xff]
      %v333 = vld [vmem:[%s301 + $0xc0] sm:$0xff]
      %v334 = vld [vmem:[%s301 + $0xc8] sm:$0xff]
      %v335 = vld [vmem:[%s301 + $0xd0] sm:$0xff]
      %v336 = vld [vmem:[%s301 + $0xd8] sm:$0xff]
      %v337 = vld [vmem:[%s301 + $0xe0] sm:$0xff]
      %v338 = vld [vmem:[%s301 + $0xe8] sm:$0xff]
      %v339 = vld [vmem:[%s301 + $0xf0] sm:$0xff]
      %v340 = vld [vmem:[%s301 + $0xf8] sm:$0xff]
      %v341 = vld [vmem:[%s1] sm:$0xff]
      %v342 = vld [vmem:[%s1 + $0x8] sm:$0xff]
      %v343 = vld [vmem:[%s2] sm:$0x1]
      %v345 = vlaneseq
      %v346 = vshrl.u32 %v345, 7
      %v347 = vsub.s32 0, %v346
      %v348 = vrot.slane %v343, %v347
      %vm350 = vcmask 130048
      %v352 = vsel %vm350, %v309, 0
      %v355 = vsel %vm350, %v310, 0
      %v358 = vsel %vm350, %v311, 0
      %v361 = vsel %vm350, %v312, 0
      %v364 = vsel %vm350, %v313, 0
      %v367 = vsel %vm350, %v314, 0
      %v370 = vsel %vm350, %v315, 0
      %v373 = vsel %vm350, %v316, 0
      %v376 = vsel %vm350, %v317, 0
      %v379 = vsel %vm350, %v318, 0
      %v382 = vsel %vm350, %v319, 0
      %v385 = vsel %vm350, %v320, 0
      %v388 = vsel %vm350, %v321, 0
      %v391 = vsel %vm350, %v322, 0
      %v394 = vsel %vm350, %v323, 0
      %v397 = vsel %vm350, %v324, 0
      %v400 = vsel %vm350, %v325, 0
      %v403 = vsel %vm350, %v326, 0
      %v406 = vsel %vm350, %v327, 0
      %v409 = vsel %vm350, %v328, 0
      %v412 = vsel %vm350, %v329, 0
      %v415 = vsel %vm350, %v330, 0
      %v418 = vsel %vm350, %v331, 0
      %v421 = vsel %vm350, %v332, 0
      %v424 = vsel %vm350, %v333, 0
      %v427 = vsel %vm350, %v334, 0
      %v430 = vsel %vm350, %v335, 0
      %v433 = vsel %vm350, %v336, 0
      %v436 = vsel %vm350, %v337, 0
      %v439 = vsel %vm350, %v338, 0
      %v442 = vsel %vm350, %v339, 0
      %v445 = vsel %vm350, %v340, 0
      %447 = vmatprep.subr.mxu0 0.0
      %448 = vmatpush1.msra.mxu0 %v341
      %449 = vmatprep.subr.mxu0 0.0
      %450 = vmatpush1.msra.mxu0 %v342
      %451 = vmatprep.subr.mxu0 0.0
      %452 = vmatpush1.msra.mxu0 0.0
      %453 = vmatprep.subr.mxu0 0.0
      %454 = vmatpush1.msra.mxu0 0.0
      %455 = vmatprep.subr.mxu0 0.0
      %456 = vmatpush1.msra.mxu0 0.0
      %457 = vmatprep.subr.mxu0 0.0
      %458 = vmatpush1.msra.mxu0 0.0
      %459 = vmatprep.subr.mxu0 0.0
      %460 = vmatpush1.msra.mxu0 0.0
      %461 = vmatprep.subr.mxu0 0.0
      %462 = vmatpush1.msra.mxu0 0.0
      %463 = vmatprep.subr.mxu0 0.0
      %464 = vmatpush1.msra.mxu0 0.0
      %465 = vmatprep.subr.mxu0 0.0
      %466 = vmatpush1.msra.mxu0 0.0
      %467 = vmatprep.subr.mxu0 0.0
      %468 = vmatpush1.msra.mxu0 0.0
      %469 = vmatprep.subr.mxu0 0.0
      %470 = vmatpush1.msra.mxu0 0.0
      %471 = vmatprep.subr.mxu0 0.0
      %472 = vmatpush1.msra.mxu0 0.0
      %473 = vmatprep.subr.mxu0 0.0
      %474 = vmatpush1.msra.mxu0 0.0
      %475 = vmatprep.subr.mxu0 0.0
      %476 = vmatpush1.msra.mxu0 0.0
      %477 = vmatprep.subr.mxu0 0.0
      %478 = vmatpush1.msra.mxu0 0.0
      %479 = vmatprep.subr.mxu0 0.0
      %480 = vmatpush1.msra.mxu0 0.0
      %481 = vmatprep.subr.mxu0 0.0
      %482 = vmatpush1.msra.mxu0 0.0
      %483 = vmatprep.subr.mxu0 0.0
      %484 = vmatpush1.msra.mxu0 0.0
      %485 = vmatprep.subr.mxu0 0.0
      %486 = vmatpush1.msra.mxu0 0.0
      %487 = vmatprep.subr.mxu0 0.0
      %488 = vmatpush1.msra.mxu0 0.0
      %489 = vmatprep.subr.mxu0 0.0
      %490 = vmatpush1.msra.mxu0 0.0
      %491 = vmatprep.subr.mxu0 0.0
      %492 = vmatpush1.msra.mxu0 0.0
      %493 = vmatprep.subr.mxu0 0.0
      %494 = vmatpush1.msra.mxu0 0.0
      %495 = vmatprep.subr.mxu0 0.0
      %496 = vmatpush1.msra.mxu0 0.0
      %497 = vmatprep.subr.mxu0 0.0
      %498 = vmatpush1.msra.mxu0 0.0
      %499 = vmatprep.subr.mxu0 0.0
      %500 = vmatpush1.msra.mxu0 0.0
      %501 = vmatprep.subr.mxu0 0.0
      %502 = vmatpush1.msra.mxu0 0.0
      %503 = vmatprep.subr.mxu0 0.0
      %504 = vmatpush1.msra.mxu0 0.0
      %505 = vmatprep.subr.mxu0 0.0
      %506 = vmatpush1.msra.mxu0 0.0
      %507 = vmatprep.subr.mxu0 0.0
      %508 = vmatpush1.msra.mxu0 0.0
      %509 = vmatprep.subr.mxu0 0.0
      %510 = vmatpush1.msra.mxu0 0.0
      %511 = vmatprep.mubr.f32.mxu0 0.0
      %512 = vmatmul.mubr.f32.gmra.mrb[0].mxu0 %v352
      %v513 = vpop.f32.mrb[0].mxu0
      %v514 = vadd.f32 %v348, %v513
      %v515 = vpop.f32.mrb[0].mxu0
      %516 = vmatprep.mubr.f32.mxu0 0.0
      %517 = vmatmul.mubr.f32.gmra.mrb[0].mxu0 %v355
      %v518 = vpop.f32.mrb[0].mxu0
      %v519 = vadd.f32 %v348, %v518
      %v520 = vpop.f32.mrb[0].mxu0
      %521 = vmatprep.mubr.f32.mxu0 0.0
      %522 = vmatmul.mubr.f32.gmra.mrb[0].mxu0 %v358
      %v523 = vpop.f32.mrb[0].mxu0
      %v524 = vadd.f32 %v348, %v523
      %v525 = vpop.f32.mrb[0].mxu0
      %526 = vmatprep.mubr.f32.mxu0 0.0
      %527 = vmatmul.mubr.f32.gmra.mrb[0].mxu0 %v361
      %v528 = vpop.f32.mrb[0].mxu0
      %v529 = vadd.f32 %v348, %v528
      %v530 = vpop.f32.mrb[0].mxu0
      %531 = vmatprep.mubr.f32.mxu0 0.0
      %532 = vmatmul.mubr.f32.gmra.mrb[0].mxu0 %v364
      %v533 = vpop.f32.mrb[0].mxu0
      %v534 = vadd.f32 %v348, %v533
      %v535 = vpop.f32.mrb[0].mxu0
      %536 = vmatprep.mubr.f32.mxu0 0.0
      %537 = vmatmul.mubr.f32.gmra.mrb[0].mxu0 %v367
      %v538 = vpop.f32.mrb[0].mxu0
      %v539 = vadd.f32 %v348, %v538
      %v540 = vpop.f32.mrb[0].mxu0
      %541 = vmatprep.mubr.f32.mxu0 0.0
      %542 = vmatmul.mubr.f32.gmra.mrb[0].mxu0 %v370
      %v543 = vpop.f32.mrb[0].mxu0
      %v544 = vadd.f32 %v348, %v543
      %v545 = vpop.f32.mrb[0].mxu0
      %546 = vmatprep.mubr.f32.mxu0 0.0
      %547 = vmatmul.mubr.f32.gmra.mrb[0].mxu0 %v373
      %v548 = vpop.f32.mrb[0].mxu0
      %v549 = vadd.f32 %v348, %v548
      %v550 = vpop.f32.mrb[0].mxu0
      %551 = vmatprep.mubr.f32.mxu0 0.0
      %552 = vmatmul.mubr.f32.gmra.mrb[0].mxu0 %v376
      %v553 = vpop.f32.mrb[0].mxu0
      %v554 = vadd.f32 %v348, %v553
      %v555 = vpop.f32.mrb[0].mxu0
      %556 = vmatprep.mubr.f32.mxu0 0.0
      %557 = vmatmul.mubr.f32.gmra.mrb[0].mxu0 %v379
      %v558 = vpop.f32.mrb[0].mxu0
      %v559 = vadd.f32 %v348, %v558
      %v560 = vpop.f32.mrb[0].mxu0
      %561 = vmatprep.mubr.f32.mxu0 0.0
      %562 = vmatmul.mubr.f32.gmra.mrb[0].mxu0 %v382
      %v563 = vpop.f32.mrb[0].mxu0
      %v564 = vadd.f32 %v348, %v563
      %v565 = vpop.f32.mrb[0].mxu0
      %566 = vmatprep.mubr.f32.mxu0 0.0
      %567 = vmatmul.mubr.f32.gmra.mrb[0].mxu0 %v385
      %v568 = vpop.f32.mrb[0].mxu0
      %v569 = vadd.f32 %v348, %v568
      %v570 = vpop.f32.mrb[0].mxu0
      %571 = vmatprep.mubr.f32.mxu0 0.0
      %572 = vmatmul.mubr.f32.gmra.mrb[0].mxu0 %v388
      %v573 = vpop.f32.mrb[0].mxu0
      %v574 = vadd.f32 %v348, %v573
      %v575 = vpop.f32.mrb[0].mxu0
      %576 = vmatprep.mubr.f32.mxu0 0.0
      %577 = vmatmul.mubr.f32.gmra.mrb[0].mxu0 %v391
      %v578 = vpop.f32.mrb[0].mxu0
      %v579 = vadd.f32 %v348, %v578
      %v580 = vpop.f32.mrb[0].mxu0
      %581 = vmatprep.mubr.f32.mxu0 0.0
      %582 = vmatmul.mubr.f32.gmra.mrb[0].mxu0 %v394
      %v583 = vpop.f32.mrb[0].mxu0
      %v584 = vadd.f32 %v348, %v583
      %v585 = vpop.f32.mrb[0].mxu0
      %586 = vmatprep.mubr.f32.mxu0 0.0
      %587 = vmatmul.mubr.f32.gmra.mrb[0].mxu0 %v397
      %v588 = vpop.f32.mrb[0].mxu0
      %v589 = vadd.f32 %v348, %v588
      %v590 = vpop.f32.mrb[0].mxu0
      %591 = vmatprep.mubr.f32.mxu0 0.0
      %592 = vmatmul.mubr.f32.gmra.mrb[0].mxu0 %v400
      %v593 = vpop.f32.mrb[0].mxu0
      %v594 = vadd.f32 %v348, %v593
      %v595 = vpop.f32.mrb[0].mxu0
      %596 = vmatprep.mubr.f32.mxu0 0.0
      %597 = vmatmul.mubr.f32.gmra.mrb[0].mxu0 %v403
      %v598 = vpop.f32.mrb[0].mxu0
      %v599 = vadd.f32 %v348, %v598
      %v600 = vpop.f32.mrb[0].mxu0
      %601 = vmatprep.mubr.f32.mxu0 0.0
      %602 = vmatmul.mubr.f32.gmra.mrb[0].mxu0 %v406
      %v603 = vpop.f32.mrb[0].mxu0
      %v604 = vadd.f32 %v348, %v603
      %v605 = vpop.f32.mrb[0].mxu0
      %606 = vmatprep.mubr.f32.mxu0 0.0
      %607 = vmatmul.mubr.f32.gmra.mrb[0].mxu0 %v409
      %v608 = vpop.f32.mrb[0].mxu0
      %v609 = vadd.f32 %v348, %v608
      %v610 = vpop.f32.mrb[0].mxu0
      %611 = vmatprep.mubr.f32.mxu0 0.0
      %612 = vmatmul.mubr.f32.gmra.mrb[0].mxu0 %v412
      %v613 = vpop.f32.mrb[0].mxu0
      %v614 = vadd.f32 %v348, %v613
      %v615 = vpop.f32.mrb[0].mxu0
      %616 = vmatprep.mubr.f32.mxu0 0.0
      %617 = vmatmul.mubr.f32.gmra.mrb[0].mxu0 %v415
      %v618 = vpop.f32.mrb[0].mxu0
      %v619 = vadd.f32 %v348, %v618
      %v620 = vpop.f32.mrb[0].mxu0
      %621 = vmatprep.mubr.f32.mxu0 0.0
      %622 = vmatmul.mubr.f32.gmra.mrb[0].mxu0 %v418
      %v623 = vpop.f32.mrb[0].mxu0
      %v624 = vadd.f32 %v348, %v623
      %v625 = vpop.f32.mrb[0].mxu0
      %626 = vmatprep.mubr.f32.mxu0 0.0
      %627 = vmatmul.mubr.f32.gmra.mrb[0].mxu0 %v421
      %v628 = vpop.f32.mrb[0].mxu0
      %v629 = vadd.f32 %v348, %v628
      %v630 = vpop.f32.mrb[0].mxu0
      %631 = vmatprep.mubr.f32.mxu0 0.0
      %632 = vmatmul.mubr.f32.gmra.mrb[0].mxu0 %v424
      %v633 = vpop.f32.mrb[0].mxu0
      %v634 = vadd.f32 %v348, %v633
      %v635 = vpop.f32.mrb[0].mxu0
      %636 = vmatprep.mubr.f32.mxu0 0.0
      %637 = vmatmul.mubr.f32.gmra.mrb[0].mxu0 %v427
      %v638 = vpop.f32.mrb[0].mxu0
      %v639 = vadd.f32 %v348, %v638
      %v640 = vpop.f32.mrb[0].mxu0
      %641 = vmatprep.mubr.f32.mxu0 0.0
      %642 = vmatmul.mubr.f32.gmra.mrb[0].mxu0 %v430
      %v643 = vpop.f32.mrb[0].mxu0
      %v644 = vadd.f32 %v348, %v643
      %v645 = vpop.f32.mrb[0].mxu0
      %646 = vmatprep.mubr.f32.mxu0 0.0
      %647 = vmatmul.mubr.f32.gmra.mrb[0].mxu0 %v433
      %v648 = vpop.f32.mrb[0].mxu0
      %v649 = vadd.f32 %v348, %v648
      %v650 = vpop.f32.mrb[0].mxu0
      %651 = vmatprep.mubr.f32.mxu0 0.0
      %652 = vmatmul.mubr.f32.gmra.mrb[0].mxu0 %v436
      %v653 = vpop.f32.mrb[0].mxu0
      %v654 = vadd.f32 %v348, %v653
      %v655 = vpop.f32.mrb[0].mxu0
      %656 = vmatprep.mubr.f32.mxu0 0.0
      %657 = vmatmul.mubr.f32.gmra.mrb[0].mxu0 %v439
      %v658 = vpop.f32.mrb[0].mxu0
      %v659 = vadd.f32 %v348, %v658
      %v660 = vpop.f32.mrb[0].mxu0
      %661 = vmatprep.mubr.f32.mxu0 0.0
      %662 = vmatmul.mubr.f32.gmra.mrb[0].mxu0 %v442
      %v663 = vpop.f32.mrb[0].mxu0
      %v664 = vadd.f32 %v348, %v663
      %v665 = vpop.f32.mrb[0].mxu0
      %666 = vmatprep.mubr.f32.mxu0 0.0
      %667 = vmatmul.mubr.f32.gmra.mrb[0].mxu0 %v445
      %v668 = vpop.f32.mrb[0].mxu0
      %v669 = vadd.f32 %v348, %v668
      %v670 = vpop.f32.mrb[0].mxu0
      %671 = vdwg.mxu0
      %v672 = vmax.f32 %v514, 0.0
      %v673 = vmax.f32 %v519, 0.0
      %v674 = vmax.f32 %v524, 0.0
      %v675 = vmax.f32 %v529, 0.0
      %v676 = vmax.f32 %v534, 0.0
      %v677 = vmax.f32 %v539, 0.0
      %v678 = vmax.f32 %v544, 0.0
      %v679 = vmax.f32 %v549, 0.0
      %v680 = vmax.f32 %v554, 0.0
      %v681 = vmax.f32 %v559, 0.0
      %v682 = vmax.f32 %v564, 0.0
      %v683 = vmax.f32 %v569, 0.0
      %v684 = vmax.f32 %v574, 0.0
      %v685 = vmax.f32 %v579, 0.0
      %v686 = vmax.f32 %v584, 0.0
      %v687 = vmax.f32 %v589, 0.0
      %v688 = vmax.f32 %v594, 0.0
      %v689 = vmax.f32 %v599, 0.0
      %v690 = vmax.f32 %v604, 0.0
      %v691 = vmax.f32 %v609, 0.0
      %v692 = vmax.f32 %v614, 0.0
      %v693 = vmax.f32 %v619, 0.0
      %v694 = vmax.f32 %v624, 0.0
      %v695 = vmax.f32 %v629, 0.0
      %v696 = vmax.f32 %v634, 0.0
      %v697 = vmax.f32 %v639, 0.0
      %v698 = vmax.f32 %v644, 0.0
      %v699 = vmax.f32 %v649, 0.0
      %v700 = vmax.f32 %v654, 0.0
      %v701 = vmax.f32 %v659, 0.0
      %v702 = vmax.f32 %v664, 0.0
      %v703 = vmax.f32 %v669, 0.0
      %v704 = vld [vmem:[%s3] sm:$0xff]
      %v705 = vld [vmem:[%s3 + $0x8] sm:$0xff]
      %v706 = vld [vmem:[%s3 + $0x10] sm:$0xff]
      %v707 = vld [vmem:[%s3 + $0x18] sm:$0xff]
      %v708 = vld [vmem:[%s4] sm:$0x1]
      %v710 = vlaneseq
      %v711 = vshrl.u32 %v710, 7
      %v712 = vsub.s32 0, %v711
      %v713 = vrot.slane %v708, %v712
      %vm715 = vcmask 261120
      %v717 = vsel %vm715, %v672, 0
      %v720 = vsel %vm715, %v673, 0
      %v723 = vsel %vm715, %v674, 0
      %v726 = vsel %vm715, %v675, 0
      %v729 = vsel %vm715, %v676, 0
      %v732 = vsel %vm715, %v677, 0
      %v735 = vsel %vm715, %v678, 0
      %v738 = vsel %vm715, %v679, 0
      %v741 = vsel %vm715, %v680, 0
      %v744 = vsel %vm715, %v681, 0
      %v747 = vsel %vm715, %v682, 0
      %v750 = vsel %vm715, %v683, 0
      %v753 = vsel %vm715, %v684, 0
      %v756 = vsel %vm715, %v685, 0
      %v759 = vsel %vm715, %v686, 0
      %v762 = vsel %vm715, %v687, 0
      %v765 = vsel %vm715, %v688, 0
      %v768 = vsel %vm715, %v689, 0
      %v771 = vsel %vm715, %v690, 0
      %v774 = vsel %vm715, %v691, 0
      %v777 = vsel %vm715, %v692, 0
      %v780 = vsel %vm715, %v693, 0
      %v783 = vsel %vm715, %v694, 0
      %v786 = vsel %vm715, %v695, 0
      %v789 = vsel %vm715, %v696, 0
      %v792 = vsel %vm715, %v697, 0
      %v795 = vsel %vm715, %v698, 0
      %v798 = vsel %vm715, %v699, 0
      %v801 = vsel %vm715, %v700, 0
      %v804 = vsel %vm715, %v701, 0
      %v807 = vsel %vm715, %v702, 0
      %v810 = vsel %vm715, %v703, 0
      %812 = vmatprep.subr.mxu0 0.0
      %813 = vmatpush1.msra.mxu0 %v704
      %814 = vmatprep.subr.mxu0 0.0
      %815 = vmatpush1.msra.mxu0 %v705
      %816 = vmatprep.subr.mxu0 0.0
      %817 = vmatpush1.msra.mxu0 %v706
      %818 = vmatprep.subr.mxu0 0.0
      %819 = vmatpush1.msra.mxu0 %v707
      %820 = vmatprep.subr.mxu0 0.0
      %821 = vmatpush1.msra.mxu0 0.0
      %822 = vmatprep.subr.mxu0 0.0
      %823 = vmatpush1.msra.mxu0 0.0
      %824 = vmatprep.subr.mxu0 0.0
      %825 = vmatpush1.msra.mxu0 0.0
      %826 = vmatprep.subr.mxu0 0.0
      %827 = vmatpush1.msra.mxu0 0.0
      %828 = vmatprep.subr.mxu0 0.0
      %829 = vmatpush1.msra.mxu0 0.0
      %830 = vmatprep.subr.mxu0 0.0
      %831 = vmatpush1.msra.mxu0 0.0
      %832 = vmatprep.subr.mxu0 0.0
      %833 = vmatpush1.msra.mxu0 0.0
      %834 = vmatprep.subr.mxu0 0.0
      %835 = vmatpush1.msra.mxu0 0.0
      %836 = vmatprep.subr.mxu0 0.0
      %837 = vmatpush1.msra.mxu0 0.0
      %838 = vmatprep.subr.mxu0 0.0
      %839 = vmatpush1.msra.mxu0 0.0
      %840 = vmatprep.subr.mxu0 0.0
      %841 = vmatpush1.msra.mxu0 0.0
      %842 = vmatprep.subr.mxu0 0.0
      %843 = vmatpush1.msra.mxu0 0.0
      %844 = vmatprep.subr.mxu0 0.0
      %845 = vmatpush1.msra.mxu0 0.0
      %846 = vmatprep.subr.mxu0 0.0
      %847 = vmatpush1.msra.mxu0 0.0
      %848 = vmatprep.subr.mxu0 0.0
      %849 = vmatpush1.msra.mxu0 0.0
      %850 = vmatprep.subr.mxu0 0.0
      %851 = vmatpush1.msra.mxu0 0.0
      %852 = vmatprep.subr.mxu0 0.0
      %853 = vmatpush1.msra.mxu0 0.0
      %854 = vmatprep.subr.mxu0 0.0
      %855 = vmatpush1.msra.mxu0 0.0
      %856 = vmatprep.subr.mxu0 0.0
      %857 = vmatpush1.msra.mxu0 0.0
      %858 = vmatprep.subr.mxu0 0.0
      %859 = vmatpush1.msra.mxu0 0.0
      %860 = vmatprep.subr.mxu0 0.0
      %861 = vmatpush1.msra.mxu0 0.0
      %862 = vmatprep.subr.mxu0 0.0
      %863 = vmatpush1.msra.mxu0 0.0
      %864 = vmatprep.subr.mxu0 0.0
      %865 = vmatpush1.msra.mxu0 0.0
      %866 = vmatprep.subr.mxu0 0.0
      %867 = vmatpush1.msra.mxu0 0.0
      %868 = vmatprep.subr.mxu0 0.0
      %869 = vmatpush1.msra.mxu0 0.0
      %870 = vmatprep.subr.mxu0 0.0
      %871 = vmatpush1.msra.mxu0 0.0
      %872 = vmatprep.subr.mxu0 0.0
      %873 = vmatpush1.msra.mxu0 0.0
      %874 = vmatprep.subr.mxu0 0.0
      %875 = vmatpush1.msra.mxu0 0.0
      %876 = vmatprep.mubr.f32.mxu0 0.0
      %877 = vmatmul.mubr.f32.gmra.mrb[0].mxu0 %v717
      %v878 = vpop.f32.mrb[0].mxu0
      %v879 = vadd.f32 %v713, %v878
      %v880 = vpop.f32.mrb[0].mxu0
      %881 = vmatprep.mubr.f32.mxu0 0.0
      %882 = vmatmul.mubr.f32.gmra.mrb[0].mxu0 %v720
      %v883 = vpop.f32.mrb[0].mxu0
      %v884 = vadd.f32 %v713, %v883
      %v885 = vpop.f32.mrb[0].mxu0
      %886 = vmatprep.mubr.f32.mxu0 0.0
      %887 = vmatmul.mubr.f32.gmra.mrb[0].mxu0 %v723
      %v888 = vpop.f32.mrb[0].mxu0
      %v889 = vadd.f32 %v713, %v888
      %v890 = vpop.f32.mrb[0].mxu0
      %891 = vmatprep.mubr.f32.mxu0 0.0
      %892 = vmatmul.mubr.f32.gmra.mrb[0].mxu0 %v726
      %v893 = vpop.f32.mrb[0].mxu0
      %v894 = vadd.f32 %v713, %v893
      %v895 = vpop.f32.mrb[0].mxu0
      %896 = vmatprep.mubr.f32.mxu0 0.0
      %897 = vmatmul.mubr.f32.gmra.mrb[0].mxu0 %v729
      %v898 = vpop.f32.mrb[0].mxu0
      %v899 = vadd.f32 %v713, %v898
      %v900 = vpop.f32.mrb[0].mxu0
      %901 = vmatprep.mubr.f32.mxu0 0.0
      %902 = vmatmul.mubr.f32.gmra.mrb[0].mxu0 %v732
      %v903 = vpop.f32.mrb[0].mxu0
      %v904 = vadd.f32 %v713, %v903
      %v905 = vpop.f32.mrb[0].mxu0
      %906 = vmatprep.mubr.f32.mxu0 0.0
      %907 = vmatmul.mubr.f32.gmra.mrb[0].mxu0 %v735
      %v908 = vpop.f32.mrb[0].mxu0
      %v909 = vadd.f32 %v713, %v908
      %v910 = vpop.f32.mrb[0].mxu0
      %911 = vmatprep.mubr.f32.mxu0 0.0
      %912 = vmatmul.mubr.f32.gmra.mrb[0].mxu0 %v738
      %v913 = vpop.f32.mrb[0].mxu0
      %v914 = vadd.f32 %v713, %v913
      %v915 = vpop.f32.mrb[0].mxu0
      %916 = vmatprep.mubr.f32.mxu0 0.0
      %917 = vmatmul.mubr.f32.gmra.mrb[0].mxu0 %v741
      %v918 = vpop.f32.mrb[0].mxu0
      %v919 = vadd.f32 %v713, %v918
      %v920 = vpop.f32.mrb[0].mxu0
      %921 = vmatprep.mubr.f32.mxu0 0.0
      %922 = vmatmul.mubr.f32.gmra.mrb[0].mxu0 %v744
      %v923 = vpop.f32.mrb[0].mxu0
      %v924 = vadd.f32 %v713, %v923
      %v925 = vpop.f32.mrb[0].mxu0
      %926 = vmatprep.mubr.f32.mxu0 0.0
      %927 = vmatmul.mubr.f32.gmra.mrb[0].mxu0 %v747
      %v928 = vpop.f32.mrb[0].mxu0
      %v929 = vadd.f32 %v713, %v928
      %v930 = vpop.f32.mrb[0].mxu0
      %931 = vmatprep.mubr.f32.mxu0 0.0
      %932 = vmatmul.mubr.f32.gmra.mrb[0].mxu0 %v750
      %v933 = vpop.f32.mrb[0].mxu0
      %v934 = vadd.f32 %v713, %v933
      %v935 = vpop.f32.mrb[0].mxu0
      %936 = vmatprep.mubr.f32.mxu0 0.0
      %937 = vmatmul.mubr.f32.gmra.mrb[0].mxu0 %v753
      %v938 = vpop.f32.mrb[0].mxu0
      %v939 = vadd.f32 %v713, %v938
      %v940 = vpop.f32.mrb[0].mxu0
      %941 = vmatprep.mubr.f32.mxu0 0.0
      %942 = vmatmul.mubr.f32.gmra.mrb[0].mxu0 %v756
      %v943 = vpop.f32.mrb[0].mxu0
      %v944 = vadd.f32 %v713, %v943
      %v945 = vpop.f32.mrb[0].mxu0
      %946 = vmatprep.mubr.f32.mxu0 0.0
      %947 = vmatmul.mubr.f32.gmra.mrb[0].mxu0 %v759
      %v948 = vpop.f32.mrb[0].mxu0
      %v949 = vadd.f32 %v713, %v948
      %v950 = vpop.f32.mrb[0].mxu0
      %951 = vmatprep.mubr.f32.mxu0 0.0
      %952 = vmatmul.mubr.f32.gmra.mrb[0].mxu0 %v762
      %v953 = vpop.f32.mrb[0].mxu0
      %v954 = vadd.f32 %v713, %v953
      %v955 = vpop.f32.mrb[0].mxu0
      %956 = vmatprep.mubr.f32.mxu0 0.0
      %957 = vmatmul.mubr.f32.gmra.mrb[0].mxu0 %v765
      %v958 = vpop.f32.mrb[0].mxu0
      %v959 = vadd.f32 %v713, %v958
      %v960 = vpop.f32.mrb[0].mxu0
      %961 = vmatprep.mubr.f32.mxu0 0.0
      %962 = vmatmul.mubr.f32.gmra.mrb[0].mxu0 %v768
      %v963 = vpop.f32.mrb[0].mxu0
      %v964 = vadd.f32 %v713, %v963
      %v965 = vpop.f32.mrb[0].mxu0
      %966 = vmatprep.mubr.f32.mxu0 0.0
      %967 = vmatmul.mubr.f32.gmra.mrb[0].mxu0 %v771
      %v968 = vpop.f32.mrb[0].mxu0
      %v969 = vadd.f32 %v713, %v968
      %v970 = vpop.f32.mrb[0].mxu0
      %971 = vmatprep.mubr.f32.mxu0 0.0
      %972 = vmatmul.mubr.f32.gmra.mrb[0].mxu0 %v774
      %v973 = vpop.f32.mrb[0].mxu0
      %v974 = vadd.f32 %v713, %v973
      %v975 = vpop.f32.mrb[0].mxu0
      %976 = vmatprep.mubr.f32.mxu0 0.0
      %977 = vmatmul.mubr.f32.gmra.mrb[0].mxu0 %v777
      %v978 = vpop.f32.mrb[0].mxu0
      %v979 = vadd.f32 %v713, %v978
      %v980 = vpop.f32.mrb[0].mxu0
      %981 = vmatprep.mubr.f32.mxu0 0.0
      %982 = vmatmul.mubr.f32.gmra.mrb[0].mxu0 %v780
      %v983 = vpop.f32.mrb[0].mxu0
      %v984 = vadd.f32 %v713, %v983
      %v985 = vpop.f32.mrb[0].mxu0
      %986 = vmatprep.mubr.f32.mxu0 0.0
      %987 = vmatmul.mubr.f32.gmra.mrb[0].mxu0 %v783
      %v988 = vpop.f32.mrb[0].mxu0
      %v989 = vadd.f32 %v713, %v988
      %v990 = vpop.f32.mrb[0].mxu0
      %991 = vmatprep.mubr.f32.mxu0 0.0
      %992 = vmatmul.mubr.f32.gmra.mrb[0].mxu0 %v786
      %v993 = vpop.f32.mrb[0].mxu0
      %v994 = vadd.f32 %v713, %v993
      %v995 = vpop.f32.mrb[0].mxu0
      %996 = vmatprep.mubr.f32.mxu0 0.0
      %997 = vmatmul.mubr.f32.gmra.mrb[0].mxu0 %v789
      %v998 = vpop.f32.mrb[0].mxu0
      %v999 = vadd.f32 %v713, %v998
      %v1000 = vpop.f32.mrb[0].mxu0
      %1001 = vmatprep.mubr.f32.mxu0 0.0
      %1002 = vmatmul.mubr.f32.gmra.mrb[0].mxu0 %v792
      %v1003 = vpop.f32.mrb[0].mxu0
      %v1004 = vadd.f32 %v713, %v1003
      %v1005 = vpop.f32.mrb[0].mxu0
      %1006 = vmatprep.mubr.f32.mxu0 0.0
      %1007 = vmatmul.mubr.f32.gmra.mrb[0].mxu0 %v795
      %v1008 = vpop.f32.mrb[0].mxu0
      %v1009 = vadd.f32 %v713, %v1008
      %v1010 = vpop.f32.mrb[0].mxu0
      %1011 = vmatprep.mubr.f32.mxu0 0.0
      %1012 = vmatmul.mubr.f32.gmra.mrb[0].mxu0 %v798
      %v1013 = vpop.f32.mrb[0].mxu0
      %v1014 = vadd.f32 %v713, %v1013
      %v1015 = vpop.f32.mrb[0].mxu0
      %1016 = vmatprep.mubr.f32.mxu0 0.0
      %1017 = vmatmul.mubr.f32.gmra.mrb[0].mxu0 %v801
      %v1018 = vpop.f32.mrb[0].mxu0
      %v1019 = vadd.f32 %v713, %v1018
      %v1020 = vpop.f32.mrb[0].mxu0
      %1021 = vmatprep.mubr.f32.mxu0 0.0
      %1022 = vmatmul.mubr.f32.gmra.mrb[0].mxu0 %v804
      %v1023 = vpop.f32.mrb[0].mxu0
      %v1024 = vadd.f32 %v713, %v1023
      %v1025 = vpop.f32.mrb[0].mxu0
      %1026 = vmatprep.mubr.f32.mxu0 0.0
      %1027 = vmatmul.mubr.f32.gmra.mrb[0].mxu0 %v807
      %v1028 = vpop.f32.mrb[0].mxu0
      %v1029 = vadd.f32 %v713, %v1028
      %v1030 = vpop.f32.mrb[0].mxu0
      %1031 = vmatprep.mubr.f32.mxu0 0.0
      %1032 = vmatmul.mubr.f32.gmra.mrb[0].mxu0 %v810
      %v1033 = vpop.f32.mrb[0].mxu0
      %v1034 = vadd.f32 %v713, %v1033
      %v1035 = vpop.f32.mrb[0].mxu0
      %1036 = vdwg.mxu0
      %v1037 = vmax.f32 %v879, 0.0
      %v1038 = vmax.f32 %v884, 0.0
      %v1039 = vmax.f32 %v889, 0.0
      %v1040 = vmax.f32 %v894, 0.0
      %v1041 = vmax.f32 %v899, 0.0
      %v1042 = vmax.f32 %v904, 0.0
      %v1043 = vmax.f32 %v909, 0.0
      %v1044 = vmax.f32 %v914, 0.0
      %v1045 = vmax.f32 %v919, 0.0
      %v1046 = vmax.f32 %v924, 0.0
      %v1047 = vmax.f32 %v929, 0.0
      %v1048 = vmax.f32 %v934, 0.0
      %v1049 = vmax.f32 %v939, 0.0
      %v1050 = vmax.f32 %v944, 0.0
      %v1051 = vmax.f32 %v949, 0.0
      %v1052 = vmax.f32 %v954, 0.0
      %v1053 = vmax.f32 %v959, 0.0
      %v1054 = vmax.f32 %v964, 0.0
      %v1055 = vmax.f32 %v969, 0.0
      %v1056 = vmax.f32 %v974, 0.0
      %v1057 = vmax.f32 %v979, 0.0
      %v1058 = vmax.f32 %v984, 0.0
      %v1059 = vmax.f32 %v989, 0.0
      %v1060 = vmax.f32 %v994, 0.0
      %v1061 = vmax.f32 %v999, 0.0
      %v1062 = vmax.f32 %v1004, 0.0
      %v1063 = vmax.f32 %v1009, 0.0
      %v1064 = vmax.f32 %v1014, 0.0
      %v1065 = vmax.f32 %v1019, 0.0
      %v1066 = vmax.f32 %v1024, 0.0
      %v1067 = vmax.f32 %v1029, 0.0
      %v1068 = vmax.f32 %v1034, 0.0
      %v1069 = vld [vmem:[%s5] sm:$0xff]
      %v1070 = vld [vmem:[%s5 + $0x8] sm:$0xff]
      %v1071 = vld [vmem:[%s5 + $0x10] sm:$0xff]
      %v1072 = vld [vmem:[%s5 + $0x18] sm:$0xff]
      %v1073 = vld [vmem:[%s6] sm:$0x1]
      %v1075 = vlaneseq
      %v1076 = vshrl.u32 %v1075, 7
      %v1077 = vsub.s32 0, %v1076
      %v1078 = vrot.slane %v1073, %v1077
      %v1081 = vsel %vm715, %v1037, 0
      %v1084 = vsel %vm715, %v1038, 0
      %v1087 = vsel %vm715, %v1039, 0
      %v1090 = vsel %vm715, %v1040, 0
      %v1093 = vsel %vm715, %v1041, 0
      %v1096 = vsel %vm715, %v1042, 0
      %v1099 = vsel %vm715, %v1043, 0
      %v1102 = vsel %vm715, %v1044, 0
      %v1105 = vsel %vm715, %v1045, 0
      %v1108 = vsel %vm715, %v1046, 0
      %v1111 = vsel %vm715, %v1047, 0
      %v1114 = vsel %vm715, %v1048, 0
      %v1117 = vsel %vm715, %v1049, 0
      %v1120 = vsel %vm715, %v1050, 0
      %v1123 = vsel %vm715, %v1051, 0
      %v1126 = vsel %vm715, %v1052, 0
      %v1129 = vsel %vm715, %v1053, 0
      %v1132 = vsel %vm715, %v1054, 0
      %v1135 = vsel %vm715, %v1055, 0
      %v1138 = vsel %vm715, %v1056, 0
      %v1141 = vsel %vm715, %v1057, 0
      %v1144 = vsel %vm715, %v1058, 0
      %v1147 = vsel %vm715, %v1059, 0
      %v1150 = vsel %vm715, %v1060, 0
      %v1153 = vsel %vm715, %v1061, 0
      %v1156 = vsel %vm715, %v1062, 0
      %v1159 = vsel %vm715, %v1063, 0
      %v1162 = vsel %vm715, %v1064, 0
      %v1165 = vsel %vm715, %v1065, 0
      %v1168 = vsel %vm715, %v1066, 0
      %v1171 = vsel %vm715, %v1067, 0
      %v1174 = vsel %vm715, %v1068, 0
      %1176 = vmatprep.subr.mxu0 0.0
      %1177 = vmatpush1.msra.mxu0 %v1069
      %1178 = vmatprep.subr.mxu0 0.0
      %1179 = vmatpush1.msra.mxu0 %v1070
      %1180 = vmatprep.subr.mxu0 0.0
      %1181 = vmatpush1.msra.mxu0 %v1071
      %1182 = vmatprep.subr.mxu0 0.0
      %1183 = vmatpush1.msra.mxu0 %v1072
      %1184 = vmatprep.subr.mxu0 0.0
      %1185 = vmatpush1.msra.mxu0 0.0
      %1186 = vmatprep.subr.mxu0 0.0
      %1187 = vmatpush1.msra.mxu0 0.0
      %1188 = vmatprep.subr.mxu0 0.0
      %1189 = vmatpush1.msra.mxu0 0.0
      %1190 = vmatprep.subr.mxu0 0.0
      %1191 = vmatpush1.msra.mxu0 0.0
      %1192 = vmatprep.subr.mxu0 0.0
      %1193 = vmatpush1.msra.mxu0 0.0
      %1194 = vmatprep.subr.mxu0 0.0
      %1195 = vmatpush1.msra.mxu0 0.0
      %1196 = vmatprep.subr.mxu0 0.0
      %1197 = vmatpush1.msra.mxu0 0.0
      %1198 = vmatprep.subr.mxu0 0.0
      %1199 = vmatpush1.msra.mxu0 0.0
      %1200 = vmatprep.subr.mxu0 0.0
      %1201 = vmatpush1.msra.mxu0 0.0
      %1202 = vmatprep.subr.mxu0 0.0
      %1203 = vmatpush1.msra.mxu0 0.0
      %1204 = vmatprep.subr.mxu0 0.0
      %1205 = vmatpush1.msra.mxu0 0.0
      %1206 = vmatprep.subr.mxu0 0.0
      %1207 = vmatpush1.msra.mxu0 0.0
      %1208 = vmatprep.subr.mxu0 0.0
      %1209 = vmatpush1.msra.mxu0 0.0
      %1210 = vmatprep.subr.mxu0 0.0
      %1211 = vmatpush1.msra.mxu0 0.0
      %1212 = vmatprep.subr.mxu0 0.0
      %1213 = vmatpush1.msra.mxu0 0.0
      %1214 = vmatprep.subr.mxu0 0.0
      %1215 = vmatpush1.msra.mxu0 0.0
      %1216 = vmatprep.subr.mxu0 0.0
      %1217 = vmatpush1.msra.mxu0 0.0
      %1218 = vmatprep.subr.mxu0 0.0
      %1219 = vmatpush1.msra.mxu0 0.0
      %1220 = vmatprep.subr.mxu0 0.0
      %1221 = vmatpush1.msra.mxu0 0.0
      %1222 = vmatprep.subr.mxu0 0.0
      %1223 = vmatpush1.msra.mxu0 0.0
      %1224 = vmatprep.subr.mxu0 0.0
      %1225 = vmatpush1.msra.mxu0 0.0
      %1226 = vmatprep.subr.mxu0 0.0
      %1227 = vmatpush1.msra.mxu0 0.0
      %1228 = vmatprep.subr.mxu0 0.0
      %1229 = vmatpush1.msra.mxu0 0.0
      %1230 = vmatprep.subr.mxu0 0.0
      %1231 = vmatpush1.msra.mxu0 0.0
      %1232 = vmatprep.subr.mxu0 0.0
      %1233 = vmatpush1.msra.mxu0 0.0
      %1234 = vmatprep.subr.mxu0 0.0
      %1235 = vmatpush1.msra.mxu0 0.0
      %1236 = vmatprep.subr.mxu0 0.0
      %1237 = vmatpush1.msra.mxu0 0.0
      %1238 = vmatprep.subr.mxu0 0.0
      %1239 = vmatpush1.msra.mxu0 0.0
      %1240 = vmatprep.mubr.f32.mxu0 0.0
      %1241 = vmatmul.mubr.f32.gmra.mrb[0].mxu0 %v1081
      %v1242 = vpop.f32.mrb[0].mxu0
      %v1243 = vadd.f32 %v1078, %v1242
      %v1244 = vpop.f32.mrb[0].mxu0
      %1245 = vmatprep.mubr.f32.mxu0 0.0
      %1246 = vmatmul.mubr.f32.gmra.mrb[0].mxu0 %v1084
      %v1247 = vpop.f32.mrb[0].mxu0
      %v1248 = vadd.f32 %v1078, %v1247
      %v1249 = vpop.f32.mrb[0].mxu0
      %1250 = vmatprep.mubr.f32.mxu0 0.0
      %1251 = vmatmul.mubr.f32.gmra.mrb[0].mxu0 %v1087
      %v1252 = vpop.f32.mrb[0].mxu0
      %v1253 = vadd.f32 %v1078, %v1252
      %v1254 = vpop.f32.mrb[0].mxu0
      %1255 = vmatprep.mubr.f32.mxu0 0.0
      %1256 = vmatmul.mubr.f32.gmra.mrb[0].mxu0 %v1090
      %v1257 = vpop.f32.mrb[0].mxu0
      %v1258 = vadd.f32 %v1078, %v1257
      %v1259 = vpop.f32.mrb[0].mxu0
      %1260 = vmatprep.mubr.f32.mxu0 0.0
      %1261 = vmatmul.mubr.f32.gmra.mrb[0].mxu0 %v1093
      %v1262 = vpop.f32.mrb[0].mxu0
      %v1263 = vadd.f32 %v1078, %v1262
      %v1264 = vpop.f32.mrb[0].mxu0
      %1265 = vmatprep.mubr.f32.mxu0 0.0
      %1266 = vmatmul.mubr.f32.gmra.mrb[0].mxu0 %v1096
      %v1267 = vpop.f32.mrb[0].mxu0
      %v1268 = vadd.f32 %v1078, %v1267
      %v1269 = vpop.f32.mrb[0].mxu0
      %1270 = vmatprep.mubr.f32.mxu0 0.0
      %1271 = vmatmul.mubr.f32.gmra.mrb[0].mxu0 %v1099
      %v1272 = vpop.f32.mrb[0].mxu0
      %v1273 = vadd.f32 %v1078, %v1272
      %v1274 = vpop.f32.mrb[0].mxu0
      %1275 = vmatprep.mubr.f32.mxu0 0.0
      %1276 = vmatmul.mubr.f32.gmra.mrb[0].mxu0 %v1102
      %v1277 = vpop.f32.mrb[0].mxu0
      %v1278 = vadd.f32 %v1078, %v1277
      %v1279 = vpop.f32.mrb[0].mxu0
      %1280 = vmatprep.mubr.f32.mxu0 0.0
      %1281 = vmatmul.mubr.f32.gmra.mrb[0].mxu0 %v1105
      %v1282 = vpop.f32.mrb[0].mxu0
      %v1283 = vadd.f32 %v1078, %v1282
      %v1284 = vpop.f32.mrb[0].mxu0
      %1285 = vmatprep.mubr.f32.mxu0 0.0
      %1286 = vmatmul.mubr.f32.gmra.mrb[0].mxu0 %v1108
      %v1287 = vpop.f32.mrb[0].mxu0
      %v1288 = vadd.f32 %v1078, %v1287
      %v1289 = vpop.f32.mrb[0].mxu0
      %1290 = vmatprep.mubr.f32.mxu0 0.0
      %1291 = vmatmul.mubr.f32.gmra.mrb[0].mxu0 %v1111
      %v1292 = vpop.f32.mrb[0].mxu0
      %v1293 = vadd.f32 %v1078, %v1292
      %v1294 = vpop.f32.mrb[0].mxu0
      %1295 = vmatprep.mubr.f32.mxu0 0.0
      %1296 = vmatmul.mubr.f32.gmra.mrb[0].mxu0 %v1114
      %v1297 = vpop.f32.mrb[0].mxu0
      %v1298 = vadd.f32 %v1078, %v1297
      %v1299 = vpop.f32.mrb[0].mxu0
      %1300 = vmatprep.mubr.f32.mxu0 0.0
      %1301 = vmatmul.mubr.f32.gmra.mrb[0].mxu0 %v1117
      %v1302 = vpop.f32.mrb[0].mxu0
      %v1303 = vadd.f32 %v1078, %v1302
      %v1304 = vpop.f32.mrb[0].mxu0
      %1305 = vmatprep.mubr.f32.mxu0 0.0
      %1306 = vmatmul.mubr.f32.gmra.mrb[0].mxu0 %v1120
      %v1307 = vpop.f32.mrb[0].mxu0
      %v1308 = vadd.f32 %v1078, %v1307
      %v1309 = vpop.f32.mrb[0].mxu0
      %1310 = vmatprep.mubr.f32.mxu0 0.0
      %1311 = vmatmul.mubr.f32.gmra.mrb[0].mxu0 %v1123
      %v1312 = vpop.f32.mrb[0].mxu0
      %v1313 = vadd.f32 %v1078, %v1312
      %v1314 = vpop.f32.mrb[0].mxu0
      %1315 = vmatprep.mubr.f32.mxu0 0.0
      %1316 = vmatmul.mubr.f32.gmra.mrb[0].mxu0 %v1126
      %v1317 = vpop.f32.mrb[0].mxu0
      %v1318 = vadd.f32 %v1078, %v1317
      %v1319 = vpop.f32.mrb[0].mxu0
      %1320 = vmatprep.mubr.f32.mxu0 0.0
      %1321 = vmatmul.mubr.f32.gmra.mrb[0].mxu0 %v1129
      %v1322 = vpop.f32.mrb[0].mxu0
      %v1323 = vadd.f32 %v1078, %v1322
      %v1324 = vpop.f32.mrb[0].mxu0
      %1325 = vmatprep.mubr.f32.mxu0 0.0
      %1326 = vmatmul.mubr.f32.gmra.mrb[0].mxu0 %v1132
      %v1327 = vpop.f32.mrb[0].mxu0
      %v1328 = vadd.f32 %v1078, %v1327
      %v1329 = vpop.f32.mrb[0].mxu0
      %1330 = vmatprep.mubr.f32.mxu0 0.0
      %1331 = vmatmul.mubr.f32.gmra.mrb[0].mxu0 %v1135
      %v1332 = vpop.f32.mrb[0].mxu0
      %v1333 = vadd.f32 %v1078, %v1332
      %v1334 = vpop.f32.mrb[0].mxu0
      %1335 = vmatprep.mubr.f32.mxu0 0.0
      %1336 = vmatmul.mubr.f32.gmra.mrb[0].mxu0 %v1138
      %v1337 = vpop.f32.mrb[0].mxu0
      %v1338 = vadd.f32 %v1078, %v1337
      %v1339 = vpop.f32.mrb[0].mxu0
      %1340 = vmatprep.mubr.f32.mxu0 0.0
      %1341 = vmatmul.mubr.f32.gmra.mrb[0].mxu0 %v1141
      %v1342 = vpop.f32.mrb[0].mxu0
      %v1343 = vadd.f32 %v1078, %v1342
      %v1344 = vpop.f32.mrb[0].mxu0
      %1345 = vmatprep.mubr.f32.mxu0 0.0
      %1346 = vmatmul.mubr.f32.gmra.mrb[0].mxu0 %v1144
      %v1347 = vpop.f32.mrb[0].mxu0
      %v1348 = vadd.f32 %v1078, %v1347
      %v1349 = vpop.f32.mrb[0].mxu0
      %1350 = vmatprep.mubr.f32.mxu0 0.0
      %1351 = vmatmul.mubr.f32.gmra.mrb[0].mxu0 %v1147
      %v1352 = vpop.f32.mrb[0].mxu0
      %v1353 = vadd.f32 %v1078, %v1352
      %v1354 = vpop.f32.mrb[0].mxu0
      %1355 = vmatprep.mubr.f32.mxu0 0.0
      %1356 = vmatmul.mubr.f32.gmra.mrb[0].mxu0 %v1150
      %v1357 = vpop.f32.mrb[0].mxu0
      %v1358 = vadd.f32 %v1078, %v1357
      %v1359 = vpop.f32.mrb[0].mxu0
      %1360 = vmatprep.mubr.f32.mxu0 0.0
      %1361 = vmatmul.mubr.f32.gmra.mrb[0].mxu0 %v1153
      %v1362 = vpop.f32.mrb[0].mxu0
      %v1363 = vadd.f32 %v1078, %v1362
      %v1364 = vpop.f32.mrb[0].mxu0
      %1365 = vmatprep.mubr.f32.mxu0 0.0
      %1366 = vmatmul.mubr.f32.gmra.mrb[0].mxu0 %v1156
      %v1367 = vpop.f32.mrb[0].mxu0
      %v1368 = vadd.f32 %v1078, %v1367
      %v1369 = vpop.f32.mrb[0].mxu0
      %1370 = vmatprep.mubr.f32.mxu0 0.0
      %1371 = vmatmul.mubr.f32.gmra.mrb[0].mxu0 %v1159
      %v1372 = vpop.f32.mrb[0].mxu0
      %v1373 = vadd.f32 %v1078, %v1372
      %v1374 = vpop.f32.mrb[0].mxu0
      %1375 = vmatprep.mubr.f32.mxu0 0.0
      %1376 = vmatmul.mubr.f32.gmra.mrb[0].mxu0 %v1162
      %v1377 = vpop.f32.mrb[0].mxu0
      %v1378 = vadd.f32 %v1078, %v1377
      %v1379 = vpop.f32.mrb[0].mxu0
      %1380 = vmatprep.mubr.f32.mxu0 0.0
      %1381 = vmatmul.mubr.f32.gmra.mrb[0].mxu0 %v1165
      %v1382 = vpop.f32.mrb[0].mxu0
      %v1383 = vadd.f32 %v1078, %v1382
      %v1384 = vpop.f32.mrb[0].mxu0
      %1385 = vmatprep.mubr.f32.mxu0 0.0
      %1386 = vmatmul.mubr.f32.gmra.mrb[0].mxu0 %v1168
      %v1387 = vpop.f32.mrb[0].mxu0
      %v1388 = vadd.f32 %v1078, %v1387
      %v1389 = vpop.f32.mrb[0].mxu0
      %1390 = vmatprep.mubr.f32.mxu0 0.0
      %1391 = vmatmul.mubr.f32.gmra.mrb[0].mxu0 %v1171
      %v1392 = vpop.f32.mrb[0].mxu0
      %v1393 = vadd.f32 %v1078, %v1392
      %v1394 = vpop.f32.mrb[0].mxu0
      %1395 = vmatprep.mubr.f32.mxu0 0.0
      %1396 = vmatmul.mubr.f32.gmra.mrb[0].mxu0 %v1174
      %v1397 = vpop.f32.mrb[0].mxu0
      %v1398 = vadd.f32 %v1078, %v1397
      %v1399 = vpop.f32.mrb[0].mxu0
      %1400 = vdwg.mxu0
      %v1401 = vmax.f32 %v1243, 0.0
      %v1402 = vmax.f32 %v1248, 0.0
      %v1403 = vmax.f32 %v1253, 0.0
      %v1404 = vmax.f32 %v1258, 0.0
      %v1405 = vmax.f32 %v1263, 0.0
      %v1406 = vmax.f32 %v1268, 0.0
      %v1407 = vmax.f32 %v1273, 0.0
      %v1408 = vmax.f32 %v1278, 0.0
      %v1409 = vmax.f32 %v1283, 0.0
      %v1410 = vmax.f32 %v1288, 0.0
      %v1411 = vmax.f32 %v1293, 0.0
      %v1412 = vmax.f32 %v1298, 0.0
      %v1413 = vmax.f32 %v1303, 0.0
      %v1414 = vmax.f32 %v1308, 0.0
      %v1415 = vmax.f32 %v1313, 0.0
      %v1416 = vmax.f32 %v1318, 0.0
      %v1417 = vmax.f32 %v1323, 0.0
      %v1418 = vmax.f32 %v1328, 0.0
      %v1419 = vmax.f32 %v1333, 0.0
      %v1420 = vmax.f32 %v1338, 0.0
      %v1421 = vmax.f32 %v1343, 0.0
      %v1422 = vmax.f32 %v1348, 0.0
      %v1423 = vmax.f32 %v1353, 0.0
      %v1424 = vmax.f32 %v1358, 0.0
      %v1425 = vmax.f32 %v1363, 0.0
      %v1426 = vmax.f32 %v1368, 0.0
      %v1427 = vmax.f32 %v1373, 0.0
      %v1428 = vmax.f32 %v1378, 0.0
      %v1429 = vmax.f32 %v1383, 0.0
      %v1430 = vmax.f32 %v1388, 0.0
      %v1431 = vmax.f32 %v1393, 0.0
      %v1432 = vmax.f32 %v1398, 0.0
      %v1433 = vld [vmem:[%s7] sm:$0x1]
      %v1435 = vlaneseq
      %v1436 = vshrl.u32 %v1435, 7
      %v1437 = vsub.s32 0, %v1436
      %v1438 = vrot.slane %v1433, %v1437
      %v1440 = vmul.f32 %v1401, %v1438
      %v1441 = vmul.f32 %v1402, %v1438
      %v1442 = vmul.f32 %v1403, %v1438
      %v1443 = vmul.f32 %v1404, %v1438
      %v1444 = vmul.f32 %v1405, %v1438
      %v1445 = vmul.f32 %v1406, %v1438
      %v1446 = vmul.f32 %v1407, %v1438
      %v1447 = vmul.f32 %v1408, %v1438
      %v1448 = vmul.f32 %v1409, %v1438
      %v1449 = vmul.f32 %v1410, %v1438
      %v1450 = vmul.f32 %v1411, %v1438
      %v1451 = vmul.f32 %v1412, %v1438
      %v1452 = vmul.f32 %v1413, %v1438
      %v1453 = vmul.f32 %v1414, %v1438
      %v1454 = vmul.f32 %v1415, %v1438
      %v1455 = vmul.f32 %v1416, %v1438
      %v1456 = vmul.f32 %v1417, %v1438
      %v1457 = vmul.f32 %v1418, %v1438
      %v1458 = vmul.f32 %v1419, %v1438
      %v1459 = vmul.f32 %v1420, %v1438
      %v1460 = vmul.f32 %v1421, %v1438
      %v1461 = vmul.f32 %v1422, %v1438
      %v1462 = vmul.f32 %v1423, %v1438
      %v1463 = vmul.f32 %v1424, %v1438
      %v1464 = vmul.f32 %v1425, %v1438
      %v1465 = vmul.f32 %v1426, %v1438
      %v1466 = vmul.f32 %v1427, %v1438
      %v1467 = vmul.f32 %v1428, %v1438
      %v1468 = vmul.f32 %v1429, %v1438
      %v1469 = vmul.f32 %v1430, %v1438
      %v1470 = vmul.f32 %v1431, %v1438
      %v1471 = vmul.f32 %v1432, %v1438
      %v1472 = vsel %vm715, %v1440, 0.0
      %1473 = vadd.xlane.f32.xlu0 %v1472
      %v1474 = vpop.xlane.xlu0 %1473
      %v1475 = vsel %vm715, %v1441, 0.0
      %1476 = vadd.xlane.f32.xlu0 %v1475
      %v1477 = vpop.xlane.xlu0 %1476
      %v1478 = vsel %vm715, %v1442, 0.0
      %1479 = vadd.xlane.f32.xlu0 %v1478
      %v1480 = vpop.xlane.xlu0 %1479
      %v1481 = vsel %vm715, %v1443, 0.0
      %1482 = vadd.xlane.f32.xlu0 %v1481
      %v1483 = vpop.xlane.xlu0 %1482
      %v1484 = vsel %vm715, %v1444, 0.0
      %1485 = vadd.xlane.f32.xlu0 %v1484
      %v1486 = vpop.xlane.xlu0 %1485
      %v1487 = vsel %vm715, %v1445, 0.0
      %1488 = vadd.xlane.f32.xlu0 %v1487
      %v1489 = vpop.xlane.xlu0 %1488
      %v1490 = vsel %vm715, %v1446, 0.0
      %1491 = vadd.xlane.f32.xlu0 %v1490
      %v1492 = vpop.xlane.xlu0 %1491
      %v1493 = vsel %vm715, %v1447, 0.0
      %1494 = vadd.xlane.f32.xlu0 %v1493
      %v1495 = vpop.xlane.xlu0 %1494
      %v1496 = vsel %vm715, %v1448, 0.0
      %1497 = vadd.xlane.f32.xlu0 %v1496
      %v1498 = vpop.xlane.xlu0 %1497
      %v1499 = vsel %vm715, %v1449, 0.0
      %1500 = vadd.xlane.f32.xlu0 %v1499
      %v1501 = vpop.xlane.xlu0 %1500
      %v1502 = vsel %vm715, %v1450, 0.0
      %1503 = vadd.xlane.f32.xlu0 %v1502
      %v1504 = vpop.xlane.xlu0 %1503
      %v1505 = vsel %vm715, %v1451, 0.0
      %1506 = vadd.xlane.f32.xlu0 %v1505
      %v1507 = vpop.xlane.xlu0 %1506
      %v1508 = vsel %vm715, %v1452, 0.0
      %1509 = vadd.xlane.f32.xlu0 %v1508
      %v1510 = vpop.xlane.xlu0 %1509
      %v1511 = vsel %vm715, %v1453, 0.0
      %1512 = vadd.xlane.f32.xlu0 %v1511
      %v1513 = vpop.xlane.xlu0 %1512
      %v1514 = vsel %vm715, %v1454, 0.0
      %1515 = vadd.xlane.f32.xlu0 %v1514
      %v1516 = vpop.xlane.xlu0 %1515
      %v1517 = vsel %vm715, %v1455, 0.0
      %1518 = vadd.xlane.f32.xlu0 %v1517
      %v1519 = vpop.xlane.xlu0 %1518
      %v1520 = vsel %vm715, %v1456, 0.0
      %1521 = vadd.xlane.f32.xlu0 %v1520
      %v1522 = vpop.xlane.xlu0 %1521
      %v1523 = vsel %vm715, %v1457, 0.0
      %1524 = vadd.xlane.f32.xlu0 %v1523
      %v1525 = vpop.xlane.xlu0 %1524
      %v1526 = vsel %vm715, %v1458, 0.0
      %1527 = vadd.xlane.f32.xlu0 %v1526
      %v1528 = vpop.xlane.xlu0 %1527
      %v1529 = vsel %vm715, %v1459, 0.0
      %1530 = vadd.xlane.f32.xlu0 %v1529
      %v1531 = vpop.xlane.xlu0 %1530
      %v1532 = vsel %vm715, %v1460, 0.0
      %1533 = vadd.xlane.f32.xlu0 %v1532
      %v1534 = vpop.xlane.xlu0 %1533
      %v1535 = vsel %vm715, %v1461, 0.0
      %1536 = vadd.xlane.f32.xlu0 %v1535
      %v1537 = vpop.xlane.xlu0 %1536
      %v1538 = vsel %vm715, %v1462, 0.0
      %1539 = vadd.xlane.f32.xlu0 %v1538
      %v1540 = vpop.xlane.xlu0 %1539
      %v1541 = vsel %vm715, %v1463, 0.0
      %1542 = vadd.xlane.f32.xlu0 %v1541
      %v1543 = vpop.xlane.xlu0 %1542
      %v1544 = vsel %vm715, %v1464, 0.0
      %1545 = vadd.xlane.f32.xlu0 %v1544
      %v1546 = vpop.xlane.xlu0 %1545
      %v1547 = vsel %vm715, %v1465, 0.0
      %1548 = vadd.xlane.f32.xlu0 %v1547
      %v1549 = vpop.xlane.xlu0 %1548
      %v1550 = vsel %vm715, %v1466, 0.0
      %1551 = vadd.xlane.f32.xlu0 %v1550
      %v1552 = vpop.xlane.xlu0 %1551
      %v1553 = vsel %vm715, %v1467, 0.0
      %1554 = vadd.xlane.f32.xlu0 %v1553
      %v1555 = vpop.xlane.xlu0 %1554
      %v1556 = vsel %vm715, %v1468, 0.0
      %1557 = vadd.xlane.f32.xlu0 %v1556
      %v1558 = vpop.xlane.xlu0 %1557
      %v1559 = vsel %vm715, %v1469, 0.0
      %1560 = vadd.xlane.f32.xlu0 %v1559
      %v1561 = vpop.xlane.xlu0 %1560
      %v1562 = vsel %vm715, %v1470, 0.0
      %1563 = vadd.xlane.f32.xlu0 %v1562
      %v1564 = vpop.xlane.xlu0 %1563
      %v1565 = vsel %vm715, %v1471, 0.0
      %1566 = vadd.xlane.f32.xlu0 %v1565
      %v1567 = vpop.xlane.xlu0 %1566
      %vm1568 = vcmask 7168
      %1569 = vst.msk [vmem:[%s307] sm:$0xff] %vm1568, %v1474
      %1570 = vst.msk [vmem:[%s307 + $0x8] sm:$0xff] %vm1568, %v1477
      %1571 = vst.msk [vmem:[%s307 + $0x10] sm:$0xff] %vm1568, %v1480
      %1572 = vst.msk [vmem:[%s307 + $0x18] sm:$0xff] %vm1568, %v1483
      %1573 = vst.msk [vmem:[%s307 + $0x20] sm:$0xff] %vm1568, %v1486
      %1574 = vst.msk [vmem:[%s307 + $0x28] sm:$0xff] %vm1568, %v1489
      %1575 = vst.msk [vmem:[%s307 + $0x30] sm:$0xff] %vm1568, %v1492
      %1576 = vst.msk [vmem:[%s307 + $0x38] sm:$0xff] %vm1568, %v1495
      %1577 = vst.msk [vmem:[%s307 + $0x40] sm:$0xff] %vm1568, %v1498
      %1578 = vst.msk [vmem:[%s307 + $0x48] sm:$0xff] %vm1568, %v1501
      %1579 = vst.msk [vmem:[%s307 + $0x50] sm:$0xff] %vm1568, %v1504
      %1580 = vst.msk [vmem:[%s307 + $0x58] sm:$0xff] %vm1568, %v1507
      %1581 = vst.msk [vmem:[%s307 + $0x60] sm:$0xff] %vm1568, %v1510
      %1582 = vst.msk [vmem:[%s307 + $0x68] sm:$0xff] %vm1568, %v1513
      %1583 = vst.msk [vmem:[%s307 + $0x70] sm:$0xff] %vm1568, %v1516
      %1584 = vst.msk [vmem:[%s307 + $0x78] sm:$0xff] %vm1568, %v1519
      %1585 = vst.msk [vmem:[%s307 + $0x80] sm:$0xff] %vm1568, %v1522
      %1586 = vst.msk [vmem:[%s307 + $0x88] sm:$0xff] %vm1568, %v1525
      %1587 = vst.msk [vmem:[%s307 + $0x90] sm:$0xff] %vm1568, %v1528
      %1588 = vst.msk [vmem:[%s307 + $0x98] sm:$0xff] %vm1568, %v1531
      %1589 = vst.msk [vmem:[%s307 + $0xa0] sm:$0xff] %vm1568, %v1534
      %1590 = vst.msk [vmem:[%s307 + $0xa8] sm:$0xff] %vm1568, %v1537
      %1591 = vst.msk [vmem:[%s307 + $0xb0] sm:$0xff] %vm1568, %v1540
      %1592 = vst.msk [vmem:[%s307 + $0xb8] sm:$0xff] %vm1568, %v1543
      %1593 = vst.msk [vmem:[%s307 + $0xc0] sm:$0xff] %vm1568, %v1546
      %1594 = vst.msk [vmem:[%s307 + $0xc8] sm:$0xff] %vm1568, %v1549
      %1595 = vst.msk [vmem:[%s307 + $0xd0] sm:$0xff] %vm1568, %v1552
      %1596 = vst.msk [vmem:[%s307 + $0xd8] sm:$0xff] %vm1568, %v1555
      %1597 = vst.msk [vmem:[%s307 + $0xe0] sm:$0xff] %vm1568, %v1558
      %1598 = vst.msk [vmem:[%s307 + $0xe8] sm:$0xff] %vm1568, %v1561
      %1599 = vst.msk [vmem:[%s307 + $0xf0] sm:$0xff] %vm1568, %v1564
      %1600 = vst.msk [vmem:[%s307 + $0xf8] sm:$0xff] %vm1568, %v1567
      %s1601 = smul.u32 32, %s19
      %p1602 = scmp.lt.s32.totalorder %s1601, 63
      %s1603 = scalar_select %p1602, %s1601, 63
      %s1604 = smul.addr %s1603, 8
      %s1605 = scalar_lea.vmem %s8, %s1604
      // Predicated region
      $region53: #{tpu_custom_call.1} parent=51 // pred_check
        %p1606 = pneg %p210
      $region54: #{tpu_custom_call.1} parent=51 // pred_check_branch
        %1608 = sbr.rel (%p1606) target = $region56
      $region55: #{tpu_custom_call.1} parent=51 // pred_region
        %s1609 = smul.u32 32, %s19
      $region56: #{tpu_custom_call.1} parent=51 // pred_fallthru
        _
    $region52: #{tpu_custom_call.1} parent=5 // pred_fallthru
      _
    %p1610 = scmp.le.s32.totalorder 2, %s14
    // Predicated region
    $region57: #{tpu_custom_call.1} parent=5 // pred_check
      %p1611 = pneg %p1610
    $region58: #{tpu_custom_call.1} parent=5 // pred_check_branch
      %1613 = sbr.rel (%p1611) target = $region60
    $region59: #{tpu_custom_call.1} parent=5 // pred_region
      %s1614 = ssub.s32 %s14, 2
      // Predicated region
      $region61: #{tpu_custom_call.1} parent=59 // pred_check
        %p1615 = pneg %p216
      $region62: #{tpu_custom_call.1} parent=59 // pred_check_branch
        %1617 = sbr.rel (%p1615) target = $region64
      $region63: #{tpu_custom_call.1} parent=59 // pred_region
        %s1618 = smul.u32 32, %s20
        %p1619 = scmp.lt.s32.totalorder %s1618, 63
        %s1620 = scalar_select %p1619, %s1618, 63
        %s1621 = smul.addr %s1620, 8
        %s1622 = scalar_lea.vmem %s8, %s1621
      $region64: #{tpu_custom_call.1} parent=59 // pred_fallthru
        _
    $region60: #{tpu_custom_call.1} parent=5 // pred_fallthru
      _
  $region6: #{tpu_custom_call.1} parent=0 // loop_footer
    %s18 = sadd.s32 1, %s14
  $region7: #{tpu_custom_call.1} parent=0 // loop_footer_branch
    %13 = sbr.rel target = $region3
  $region8: #{tpu_custom_call.1} parent=0 // loop_exit
    _

</llo_original>
